<compile_context>
chip_gen: v7x
topology: tpu7x:2x2x1
jax: 0.10.0
libtpu: 0.0.40
codegen_flags: <defaults>
</compile_context>

<pallas_src>
import jax
import jax.numpy as jnp
from jax.experimental import pallas as pl
from jax.experimental.pallas import tpu as pltpu

EPS = 1e-5


def _make_bn_relu_conv3x3_kernel(H, W, compute_stats):
    """Fused  y = conv3x3(relu(x * scale + bias)),  stride 1, padding 1.

    Per grid step (one sample n, one row tile h), all in (C, flat-spatial):
      x_ref    : (Cin, H*W)            f32 flattened NCHW sample
      scale_ref: (Cin, 1)              folded BN scale (gamma / sqrt(var+eps))
      bias_ref : (Cin, 1)              folded BN shift (beta - mean*scale)
      w_ref    : (Cout, 9*Cin)         bf16, column index (kh*3+kw)*Cin + ci
      o_ref    : (Cout, TH*W)          lane-dense output row tile
      sum_ref  : (Cout, 1)             per-tile channel sums   (if compute_stats)
      sq_ref   : (Cout, 1)             per-tile channel sum sq (if compute_stats)
      apad_ref : (Cin, H*W + 2W + 2)   f32 scratch: flat activation, zero margins
      col_ref  : (nH, 9*Cin, TH*W)     bf16 scratch: im2col of the whole sample
    """
    HW = H * W

    def kernel(x_ref, scale_ref, bias_ref, w_ref, *outs):
        if compute_stats:
            o_ref, sum_ref, sq_ref, apad_ref, col_ref = outs
        else:
            o_ref, apad_ref, col_ref = outs

        Cin = x_ref.shape[0]
        Cout, THW = o_ref.shape
        n_tiles = col_ref.shape[0]
        h_idx = pl.program_id(1)

        # ------------------------------------------------------------------
        # Once per sample (row tile 0): folded BN + ReLU in f32, then build the
        # im2col matrix for the whole sample in VMEM (bf16 for the MXU).
        # ------------------------------------------------------------------
        @pl.when(h_idx == 0)
        def _build_im2col():
            # training-mode BatchNorm (pre-folded scale/shift) + ReLU, lane-dense
            a = jnp.maximum(x_ref[...] * scale_ref[...] + bias_ref[...], 0.0)

            # Flat activation with W+1 zero lanes on each side: vertical (kh)
            # out-of-image taps then read zeros automatically. Only the small
            # margins are zeroed; the interior is written exactly once.
            apad_ref[:, W + 1:W + 1 + HW] = a
            zmargin = jnp.zeros((Cin, W + 1), jnp.float32)
            apad_ref[:, 0:W + 1] = zmargin
            apad_ref[:, W + 1 + HW:HW + 2 * W + 2] = zmargin

            # Column index of every flat position; used to mask the kw taps
            # that would otherwise wrap into the neighbouring image row.
            c = jax.lax.broadcasted_iota(jnp.int32, (1, HW), 1) % W
            not_left = c > 0           # kw offset -1 is invalid at column 0
            not_right = c < W - 1      # kw offset +1 is invalid at column W-1

            for kh in range(3):
                for kw in range(3):
                    idx = kh * 3 + kw
                    off = (kh - 1) * W + (kw - 1)
                    tap = apad_ref[:, W + 1 + off:W + 1 + off + HW]
                    if kw == 0:
                        tap = jnp.where(not_left, tap, 0.0)
                    elif kw == 2:
                        tap = jnp.where(not_right, tap, 0.0)
                    tap = tap.astype(jnp.bfloat16)
                    for t in range(n_tiles):
                        col_ref[t, idx * Cin:(idx + 1) * Cin, :] = (
                            tap[:, t * THW:(t + 1) * THW])

        # ------------------------------------------------------------------
        # Per row tile: one MXU matmul, K = 9*Cin, bf16 in / f32 accumulate,
        # producing a lane-dense (Cout, TH*W) block (unmasked stores).
        # ------------------------------------------------------------------
        acc = jnp.dot(w_ref[...], col_ref[h_idx],
                      preferred_element_type=jnp.float32)
        o_ref[...] = acc.astype(o_ref.dtype)

        if compute_stats:
            # Partial statistics for the *next* BatchNorm, so the intermediate
            # activation never has to be re-read from HBM.
            sum_ref[...] = jnp.sum(acc, axis=1, keepdims=True)
            sq_ref[...] = jnp.sum(acc * acc, axis=1, keepdims=True)

    return kernel


def _pick_row_tile(H, W):
    """Output rows per grid step: prefer a tile whose flattened width TH*W is a
    multiple of 128 lanes (lane-dense, unmasked output stores) and that gives
    several pipeline steps; otherwise fall back to the whole image."""
    for th in (8, 16, 32, 4, 2, 1):
        if th < H and H % th == 0 and (th * W) % 128 == 0:
            return th
    return H


def _pack_conv3x3_weight(w_oihw):
    """OIHW (Cout, Cin, 3, 3) -> (Cout, 9*Cin) bf16, column (kh*3+kw)*Cin + ci."""
    Cout, Cin, KH, KW = w_oihw.shape
    w = jnp.transpose(w_oihw, (0, 2, 3, 1))        # (Cout, kh, kw, Cin)
    return w.reshape(Cout, KH * KW * Cin).astype(jnp.bfloat16)


def bn_relu_conv3x3(x_nchw, scale, bias, w_packed, *, compute_stats=True):
    """y = conv3x3(relu(x * scale + bias)), stride 1, pad 1. NCHW in / NCHW out."""
    N, Cin, H, W = x_nchw.shape
    Cout = w_packed.shape[0]
    HW = H * W
    TH = _pick_row_tile(H, W)
    nH = H // TH
    THW = TH * W

    x_flat = x_nchw.reshape(N, Cin, HW)            # contiguous, free reshape

    kernel = _make_bn_relu_conv3x3_kernel(H, W, compute_stats)

    out_shape = [jax.ShapeDtypeStruct((N, Cout, HW), x_nchw.dtype)]
    out_specs = [pl.BlockSpec((None, Cout, THW), lambda n, h: (n, 0, h))]
    if compute_stats:
        out_shape += [jax.ShapeDtypeStruct((N, nH, Cout, 1), jnp.float32)] * 2
        out_specs += [pl.BlockSpec((None, None, Cout, 1),
                                   lambda n, h: (n, h, 0, 0))] * 2

    cost = pl.CostEstimate(
        flops=2 * N * HW * 9 * Cin * Cout,
        transcendentals=0,
        bytes_accessed=(x_flat.size * x_flat.dtype.itemsize
                        + w_packed.size * 2
                        + N * Cout * HW * 4),
    )

    outs = pl.pallas_call(
        kernel,
        out_shape=tuple(out_shape) if compute_stats else out_shape[0],
        grid=(N, nH),
        in_specs=[
            pl.BlockSpec((None, Cin, HW), lambda n, h: (n, 0, 0)),
            pl.BlockSpec((Cin, 1), lambda n, h: (0, 0)),
            pl.BlockSpec((Cin, 1), lambda n, h: (0, 0)),
            pl.BlockSpec((Cout, 9 * Cin), lambda n, h: (0, 0)),
        ],
        out_specs=tuple(out_specs) if compute_stats else out_specs[0],
        scratch_shapes=[
            pltpu.VMEM((Cin, HW + 2 * W + 2), jnp.float32),   # padded activation
            pltpu.VMEM((nH, 9 * Cin, THW), jnp.bfloat16),     # im2col (bf16)
        ],
        compiler_params=pltpu.CompilerParams(
            dimension_semantics=("parallel", "arbitrary")),
        cost_estimate=cost,
    )(x_flat, scale.reshape(Cin, 1), bias.reshape(Cin, 1), w_packed)

    if compute_stats:
        y, psum, psq = outs
    else:
        y, psum, psq = outs, None, None
    return y.reshape(N, Cout, H, W), psum, psq


def basic_block_forward(x_nchw, params, stride=1):
    """Pallas BasicBlock.forward (training-mode BatchNorm, NCHW in / NCHW out)."""
    # TODO(synk): stride > 1 would need strided output-tap addressing in-kernel;
    # the module default (stride=1) is what is implemented. running_mean/var
    # buffers are not updated (forward-only; they do not affect the output).
    assert stride == 1, "only stride=1 implemented"
    N, Cin, H, W = x_nchw.shape

    w1 = _pack_conv3x3_weight(params["w1"])
    w2 = _pack_conv3x3_weight(params["w2"])

    # BN1 batch statistics over the raw input (small plain-JAX reduction).
    mean1 = jnp.mean(x_nchw, axis=(0, 2, 3))
    var1 = jnp.var(x_nchw, axis=(0, 2, 3))
    scale1 = params["gamma1"] / jnp.sqrt(var1 + EPS)
    bias1 = params["beta1"] - mean1 * scale1

    # bn1 -> relu -> conv1 ; kernel also emits BN2 partial statistics.
    out1, psum, psq = bn_relu_conv3x3(x_nchw, scale1, bias1, w1,
                                      compute_stats=True)

    # Finish BN2 mean/var from the fused per-tile sums (no extra HBM pass).
    count = N * H * W
    mean2 = jnp.sum(psum, axis=(0, 1, 3)) / count
    ex2 = jnp.sum(psq, axis=(0, 1, 3)) / count
    var2 = jnp.maximum(ex2 - mean2 * mean2, 0.0)
    scale2 = params["gamma2"] / jnp.sqrt(var2 + EPS)
    bias2 = params["beta2"] - mean2 * scale2

    # bn2 -> relu -> conv2
    out2, _, _ = bn_relu_conv3x3(out1, scale2, bias2, w2, compute_stats=False)
    return out2


# ---------------------------------------------------------------------------
# pure-JAX reference (mirrors the PyTorch forward in training mode)
def _reference_forward(x, params, *, mxu_bf16=True):
    def bn_relu(h, g, b):
        mean = jnp.mean(h, axis=(0, 2, 3), keepdims=True)
        var = jnp.var(h, axis=(0, 2, 3), keepdims=True)
        hn = (h - mean) / jnp.sqrt(var + EPS)
        return jax.nn.relu(hn * g.reshape(1, -1, 1, 1) + b.reshape(1, -1, 1, 1))

    def conv(h, w):
        if mxu_bf16:  # match the kernel's MXU precision (bf16 in, f32 accumulate)
            h = h.astype(jnp.bfloat16)
            w = w.astype(jnp.bfloat16)
        return jax.lax.conv_general_dilated(
            h, w, window_strides=(1, 1), padding="SAME",
            dimension_numbers=("NCHW", "OIHW", "NCHW"),
            preferred_element_type=jnp.float32)

    out = conv(bn_relu(x, params["gamma1"], params["beta1"]), params["w1"])
    out = conv(bn_relu(out, params["gamma2"], params["beta2"]), params["w2"])
    return out


if __name__ == "__main__":
    in_planes, planes = 4, 4
    N, H, W = 2, 16, 16

    key = jax.random.PRNGKey(0)
    kx, k1, k2 = jax.random.split(key, 3)

    x = jax.random.normal(kx, (N, in_planes, H, W), dtype=jnp.float32)

    params = {
        # BatchNorm2d default init: weight=1, bias=0
        "gamma1": jnp.ones((in_planes,), jnp.float32),
        "beta1": jnp.zeros((in_planes,), jnp.float32),
        "gamma2": jnp.ones((planes,), jnp.float32),
        "beta2": jnp.zeros((planes,), jnp.float32),
        # Conv2d weights (OIHW), deterministic synthetic init
        "w1": 0.1 * jax.random.normal(k1, (planes, in_planes, 3, 3), jnp.float32),
        "w2": 0.1 * jax.random.normal(k2, (planes, planes, 3, 3), jnp.float32),
    }

    fwd = jax.jit(basic_block_forward)
    out = jax.block_until_ready(fwd(x, params))

    # Reference at the same MXU precision (bf16 matmul inputs, f32 accumulation)
    ref = jax.block_until_ready(_reference_forward(x, params, mxu_bf16=True))
    # Full-f32 reference: looser bound that just covers bf16 MXU rounding.
    ref_f32 = jax.block_until_ready(_reference_forward(x, params, mxu_bf16=False))

    assert out.shape == (N, planes, H, W), out.shape
    assert jnp.allclose(out, ref, atol=5e-3, rtol=5e-3), (
        float(jnp.max(jnp.abs(out - ref))))
    assert jnp.allclose(out, ref_f32, atol=1e-1, rtol=1e-1), (
        float(jnp.max(jnp.abs(out - ref_f32))))

    print("KERNEL_OK")
</pallas_src>

<mosaic_0001>
module attributes {stable_mosaic.version = 11 : i64} {
  func.func @kernel(%arg0: i32, %arg1: i32, %arg2: memref<1x4x256xf32, #tpu.memory_space<vmem>>, %arg3: memref<4x1xf32, #tpu.memory_space<vmem>>, %arg4: memref<4x1xf32, #tpu.memory_space<vmem>>, %arg5: memref<4x36xbf16, #tpu.memory_space<vmem>>, %arg6: memref<1x4x128xf32, #tpu.memory_space<vmem>>, %arg7: memref<1x1x4x1xf32, #tpu.memory_space<vmem>>, %arg8: memref<1x1x4x1xf32, #tpu.memory_space<vmem>>, %arg9: memref<4x290xf32, #tpu.memory_space<vmem>>, %arg10: memref<2x36x128xbf16, #tpu.memory_space<vmem>>) attributes {dimension_semantics = [#tpu.dimension_semantics<parallel>, #tpu.dimension_semantics<arbitrary>], iteration_bounds = array<i64: 2, 2>, scalar_prefetch = 0 : i64, scratch_operands = 2 : i64, tpu.core_type = #tpu.core_type<tc>, window_params = [{transform_indices = @transform_0, window_bounds = array<i64: 1, 4, 256>}, {pipeline_mode = #tpu.pipeline_mode<synchronous>, transform_indices = @transform_1, window_bounds = array<i64: 4, 1>}, {pipeline_mode = #tpu.pipeline_mode<synchronous>, transform_indices = @transform_2, window_bounds = array<i64: 4, 1>}, {pipeline_mode = #tpu.pipeline_mode<synchronous>, transform_indices = @transform_3, window_bounds = array<i64: 4, 36>}, {transform_indices = @transform_4, window_bounds = array<i64: 1, 4, 128>}, {transform_indices = @transform_5, window_bounds = array<i64: 1, 1, 4, 1>}, {transform_indices = @transform_6, window_bounds = array<i64: 1, 1, 4, 1>}]} {
    %c0_i32 = arith.constant 0 : i32
    %0 = arith.cmpi eq, %arg1, %c0_i32 : i32
    %1 = arith.extui %0 : i1 to i32
    %c0_i32_0 = arith.constant 0 : i32
    %2 = arith.cmpi ne, %1, %c0_i32_0 : i32
    scf.if %2 {
      %c0_17 = arith.constant 0 : index
      %c0_18 = arith.constant 0 : index
      %c0_19 = arith.constant 0 : index
      %22 = vector.load %arg2[%c0_17, %c0_18, %c0_19] : memref<1x4x256xf32, #tpu.memory_space<vmem>>, vector<1x4x256xf32>
      %23 = vector.shape_cast %22 : vector<1x4x256xf32> to vector<4x256xf32>
      %c0_20 = arith.constant 0 : index
      %c0_21 = arith.constant 0 : index
      %24 = vector.load %arg3[%c0_20, %c0_21] : memref<4x1xf32, #tpu.memory_space<vmem>>, vector<4x1xf32>
      %25 = vector.broadcast %24 : vector<4x1xf32> to vector<4x256xf32>
      %26 = arith.mulf %23, %25 : vector<4x256xf32>
      %c0_22 = arith.constant 0 : index
      %c0_23 = arith.constant 0 : index
      %27 = vector.load %arg4[%c0_22, %c0_23] : memref<4x1xf32, #tpu.memory_space<vmem>>, vector<4x1xf32>
      %28 = vector.broadcast %27 : vector<4x1xf32> to vector<4x256xf32>
      %29 = arith.addf %26, %28 : vector<4x256xf32>
      %cst_24 = arith.constant 0.000000e+00 : f32
      %30 = vector.broadcast %cst_24 : f32 to vector<4x256xf32>
      %31 = arith.maximumf %29, %30 : vector<4x256xf32>
      %c0_25 = arith.constant 0 : index
      %c17 = arith.constant 17 : index
      %32 = vector.load %arg9[%c0_25, %c17] : memref<4x290xf32, #tpu.memory_space<vmem>>, vector<4x256xf32>
      tpu.vector_store %arg9[%c0_25, %c17], %31 {strides = array<i32>} : memref<4x290xf32, #tpu.memory_space<vmem>>, vector<4x256xf32>,
      %cst_26 = arith.constant 0.000000e+00 : f32
      %33 = vector.broadcast %cst_26 : f32 to vector<4x17xf32>
      %c0_27 = arith.constant 0 : index
      %c0_28 = arith.constant 0 : index
      %34 = vector.load %arg9[%c0_27, %c0_28] : memref<4x290xf32, #tpu.memory_space<vmem>>, vector<4x17xf32>
      tpu.vector_store %arg9[%c0_27, %c0_28], %33 {strides = array<i32>} : memref<4x290xf32, #tpu.memory_space<vmem>>, vector<4x17xf32>,
      %c0_29 = arith.constant 0 : index
      %c273 = arith.constant 273 : index
      %35 = vector.load %arg9[%c0_29, %c273] : memref<4x290xf32, #tpu.memory_space<vmem>>, vector<4x17xf32>
      tpu.vector_store %arg9[%c0_29, %c273], %33 {strides = array<i32>} : memref<4x290xf32, #tpu.memory_space<vmem>>, vector<4x17xf32>,
      %36 = tpu.iota {dimensions = array<i32: 1>} : vector<1x256xi32>
      %c16_i32 = arith.constant 16 : i32
      %c0_i32_30 = arith.constant 0 : i32
      %37 = arith.cmpi eq, %c16_i32, %c0_i32_30 : i32
      %c1_i32 = arith.constant 1 : i32
      %38 = arith.select %37, %c1_i32, %c16_i32 : i32
      %39 = vector.broadcast %38 : i32 to vector<1x256xi32>
      %40 = arith.remsi %36, %39 : vector<1x256xi32>
      %c0_i32_31 = arith.constant 0 : i32
      %41 = vector.broadcast %c0_i32_31 : i32 to vector<1x256xi32>
      %42 = arith.cmpi ne, %40, %41 : vector<1x256xi32>
      %c0_i32_32 = arith.constant 0 : i32
      %43 = vector.broadcast %c0_i32_32 : i32 to vector<1x256xi32>
      %44 = arith.cmpi slt, %40, %43 : vector<1x256xi32>
      %c0_i32_33 = arith.constant 0 : i32
      %45 = arith.cmpi slt, %38, %c0_i32_33 : i32
      %46 = vector.broadcast %45 : i1 to vector<1x256xi1>
      %47 = vector.broadcast %46 : vector<1x256xi1> to vector<1x256xi1>
      %48 = arith.xori %44, %47 : vector<1x256xi1>
      %49 = arith.andi %48, %42 : vector<1x256xi1>
      %50 = vector.broadcast %38 : i32 to vector<1x256xi32>
      %51 = arith.addi %40, %50 : vector<1x256xi32>
      %52 = arith.select %49, %51, %40 : vector<1x256xi1>, vector<1x256xi32>
      %c0_i32_34 = arith.constant 0 : i32
      %53 = vector.broadcast %c0_i32_34 : i32 to vector<1x256xi32>
      %54 = arith.cmpi sgt, %52, %53 : vector<1x256xi32>
      %c15_i32 = arith.constant 15 : i32
      %55 = vector.broadcast %c15_i32 : i32 to vector<1x256xi32>
      %56 = arith.cmpi slt, %52, %55 : vector<1x256xi32>
      %c0_35 = arith.constant 0 : index
      %c0_36 = arith.constant 0 : index
      %57 = vector.load %arg9[%c0_35, %c0_36] : memref<4x290xf32, #tpu.memory_space<vmem>>, vector<4x256xf32>
      %cst_37 = arith.constant 0.000000e+00 : f32
      %58 = vector.shape_cast %54 : vector<1x256xi1> to vector<1x256xi1>
      %59 = vector.broadcast %58 : vector<1x256xi1> to vector<4x256xi1>
      %60 = vector.broadcast %cst_37 : f32 to vector<4x256xf32>
      %61 = arith.select %59, %57, %60 : vector<4x256xi1>, vector<4x256xf32>
      %62 = arith.truncf %61 : vector<4x256xf32> to vector<4x256xbf16>
      %63 = vector.extract_strided_slice %62 {offsets = [0, 0], sizes = [4, 128], strides = [1, 1]} : vector<4x256xbf16> to vector<4x128xbf16>
      %c0_38 = arith.constant 0 : index
      %c0_39 = arith.constant 0 : index
      %c0_40 = arith.constant 0 : index
      %64 = vector.load %arg10[%c0_38, %c0_39, %c0_40] : memref<2x36x128xbf16, #tpu.memory_space<vmem>>, vector<1x4x128xbf16>
      %65 = vector.shape_cast %64 : vector<1x4x128xbf16> to vector<4x128xbf16>
      %66 = vector.shape_cast %63 : vector<4x128xbf16> to vector<1x4x128xbf16>
      tpu.vector_store %arg10[%c0_38, %c0_39, %c0_40], %66 {strides = array<i32>} : memref<2x36x128xbf16, #tpu.memory_space<vmem>>, vector<1x4x128xbf16>,
      %67 = vector.extract_strided_slice %62 {offsets = [0, 128], sizes = [4, 128], strides = [1, 1]} : vector<4x256xbf16> to vector<4x128xbf16>
      %c1 = arith.constant 1 : index
      %c0_41 = arith.constant 0 : index
      %c0_42 = arith.constant 0 : index
      %68 = vector.load %arg10[%c1, %c0_41, %c0_42] : memref<2x36x128xbf16, #tpu.memory_space<vmem>>, vector<1x4x128xbf16>
      %69 = vector.shape_cast %68 : vector<1x4x128xbf16> to vector<4x128xbf16>
      %70 = vector.shape_cast %67 : vector<4x128xbf16> to vector<1x4x128xbf16>
      tpu.vector_store %arg10[%c1, %c0_41, %c0_42], %70 {strides = array<i32>} : memref<2x36x128xbf16, #tpu.memory_space<vmem>>, vector<1x4x128xbf16>,
      %c0_43 = arith.constant 0 : index
      %c1_44 = arith.constant 1 : index
      %71 = vector.load %arg9[%c0_43, %c1_44] : memref<4x290xf32, #tpu.memory_space<vmem>>, vector<4x256xf32>
      %72 = arith.truncf %71 : vector<4x256xf32> to vector<4x256xbf16>
      %73 = vector.extract_strided_slice %72 {offsets = [0, 0], sizes = [4, 128], strides = [1, 1]} : vector<4x256xbf16> to vector<4x128xbf16>
      %c0_45 = arith.constant 0 : index
      %c4 = arith.constant 4 : index
      %c0_46 = arith.constant 0 : index
      %74 = vector.load %arg10[%c0_45, %c4, %c0_46] : memref<2x36x128xbf16, #tpu.memory_space<vmem>>, vector<1x4x128xbf16>
      %75 = vector.shape_cast %74 : vector<1x4x128xbf16> to vector<4x128xbf16>
      %76 = vector.shape_cast %73 : vector<4x128xbf16> to vector<1x4x128xbf16>
      tpu.vector_store %arg10[%c0_45, %c4, %c0_46], %76 {strides = array<i32>} : memref<2x36x128xbf16, #tpu.memory_space<vmem>>, vector<1x4x128xbf16>,
      %77 = vector.extract_strided_slice %72 {offsets = [0, 128], sizes = [4, 128], strides = [1, 1]} : vector<4x256xbf16> to vector<4x128xbf16>
      %c1_47 = arith.constant 1 : index
      %c4_48 = arith.constant 4 : index
      %c0_49 = arith.constant 0 : index
      %78 = vector.load %arg10[%c1_47, %c4_48, %c0_49] : memref<2x36x128xbf16, #tpu.memory_space<vmem>>, vector<1x4x128xbf16>
      %79 = vector.shape_cast %78 : vector<1x4x128xbf16> to vector<4x128xbf16>
      %80 = vector.shape_cast %77 : vector<4x128xbf16> to vector<1x4x128xbf16>
      tpu.vector_store %arg10[%c1_47, %c4_48, %c0_49], %80 {strides = array<i32>} : memref<2x36x128xbf16, #tpu.memory_space<vmem>>, vector<1x4x128xbf16>,
      %c0_50 = arith.constant 0 : index
      %c2 = arith.constant 2 : index
      %81 = vector.load %arg9[%c0_50, %c2] : memref<4x290xf32, #tpu.memory_space<vmem>>, vector<4x256xf32>
      %cst_51 = arith.constant 0.000000e+00 : f32
      %82 = vector.shape_cast %56 : vector<1x256xi1> to vector<1x256xi1>
      %83 = vector.broadcast %82 : vector<1x256xi1> to vector<4x256xi1>
      %84 = vector.broadcast %cst_51 : f32 to vector<4x256xf32>
      %85 = arith.select %83, %81, %84 : vector<4x256xi1>, vector<4x256xf32>
      %86 = arith.truncf %85 : vector<4x256xf32> to vector<4x256xbf16>
      %87 = vector.extract_strided_slice %86 {offsets = [0, 0], sizes = [4, 128], strides = [1, 1]} : vector<4x256xbf16> to vector<4x128xbf16>
      %c0_52 = arith.constant 0 : index
      %c8 = arith.constant 8 : index
      %c0_53 = arith.constant 0 : index
      %88 = vector.load %arg10[%c0_52, %c8, %c0_53] : memref<2x36x128xbf16, #tpu.memory_space<vmem>>, vector<1x4x128xbf16>
      %89 = vector.shape_cast %88 : vector<1x4x128xbf16> to vector<4x128xbf16>
      %90 = vector.shape_cast %87 : vector<4x128xbf16> to vector<1x4x128xbf16>
      tpu.vector_store %arg10[%c0_52, %c8, %c0_53], %90 {strides = array<i32>} : memref<2x36x128xbf16, #tpu.memory_space<vmem>>, vector<1x4x128xbf16>,
      %91 = vector.extract_strided_slice %86 {offsets = [0, 128], sizes = [4, 128], strides = [1, 1]} : vector<4x256xbf16> to vector<4x128xbf16>
      %c1_54 = arith.constant 1 : index
      %c8_55 = arith.constant 8 : index
      %c0_56 = arith.constant 0 : index
      %92 = vector.load %arg10[%c1_54, %c8_55, %c0_56] : memref<2x36x128xbf16, #tpu.memory_space<vmem>>, vector<1x4x128xbf16>
      %93 = vector.shape_cast %92 : vector<1x4x128xbf16> to vector<4x128xbf16>
      %94 = vector.shape_cast %91 : vector<4x128xbf16> to vector<1x4x128xbf16>
      tpu.vector_store %arg10[%c1_54, %c8_55, %c0_56], %94 {strides = array<i32>} : memref<2x36x128xbf16, #tpu.memory_space<vmem>>, vector<1x4x128xbf16>,
      %c0_57 = arith.constant 0 : index
      %c16 = arith.constant 16 : index
      %95 = vector.load %arg9[%c0_57, %c16] : memref<4x290xf32, #tpu.memory_space<vmem>>, vector<4x256xf32>
      %cst_58 = arith.constant 0.000000e+00 : f32
      %96 = vector.shape_cast %54 : vector<1x256xi1> to vector<1x256xi1>
      %97 = vector.broadcast %96 : vector<1x256xi1> to vector<4x256xi1>
      %98 = vector.broadcast %cst_58 : f32 to vector<4x256xf32>
      %99 = arith.select %97, %95, %98 : vector<4x256xi1>, vector<4x256xf32>
      %100 = arith.truncf %99 : vector<4x256xf32> to vector<4x256xbf16>
      %101 = vector.extract_strided_slice %100 {offsets = [0, 0], sizes = [4, 128], strides = [1, 1]} : vector<4x256xbf16> to vector<4x128xbf16>
      %c0_59 = arith.constant 0 : index
      %c12 = arith.constant 12 : index
      %c0_60 = arith.constant 0 : index
      %102 = vector.load %arg10[%c0_59, %c12, %c0_60] : memref<2x36x128xbf16, #tpu.memory_space<vmem>>, vector<1x4x128xbf16>
      %103 = vector.shape_cast %102 : vector<1x4x128xbf16> to vector<4x128xbf16>
      %104 = vector.shape_cast %101 : vector<4x128xbf16> to vector<1x4x128xbf16>
      tpu.vector_store %arg10[%c0_59, %c12, %c0_60], %104 {strides = array<i32>} : memref<2x36x128xbf16, #tpu.memory_space<vmem>>, vector<1x4x128xbf16>,
      %105 = vector.extract_strided_slice %100 {offsets = [0, 128], sizes = [4, 128], strides = [1, 1]} : vector<4x256xbf16> to vector<4x128xbf16>
      %c1_61 = arith.constant 1 : index
      %c12_62 = arith.constant 12 : index
      %c0_63 = arith.constant 0 : index
      %106 = vector.load %arg10[%c1_61, %c12_62, %c0_63] : memref<2x36x128xbf16, #tpu.memory_space<vmem>>, vector<1x4x128xbf16>
      %107 = vector.shape_cast %106 : vector<1x4x128xbf16> to vector<4x128xbf16>
      %108 = vector.shape_cast %105 : vector<4x128xbf16> to vector<1x4x128xbf16>
      tpu.vector_store %arg10[%c1_61, %c12_62, %c0_63], %108 {strides = array<i32>} : memref<2x36x128xbf16, #tpu.memory_space<vmem>>, vector<1x4x128xbf16>,
      %c0_64 = arith.constant 0 : index
      %c17_65 = arith.constant 17 : index
      %109 = vector.load %arg9[%c0_64, %c17_65] : memref<4x290xf32, #tpu.memory_space<vmem>>, vector<4x256xf32>
      %110 = arith.truncf %109 : vector<4x256xf32> to vector<4x256xbf16>
      %111 = vector.extract_strided_slice %110 {offsets = [0, 0], sizes = [4, 128], strides = [1, 1]} : vector<4x256xbf16> to vector<4x128xbf16>
      %c0_66 = arith.constant 0 : index
      %c16_67 = arith.constant 16 : index
      %c0_68 = arith.constant 0 : index
      %112 = vector.load %arg10[%c0_66, %c16_67, %c0_68] : memref<2x36x128xbf16, #tpu.memory_space<vmem>>, vector<1x4x128xbf16>
      %113 = vector.shape_cast %112 : vector<1x4x128xbf16> to vector<4x128xbf16>
      %114 = vector.shape_cast %111 : vector<4x128xbf16> to vector<1x4x128xbf16>
      tpu.vector_store %arg10[%c0_66, %c16_67, %c0_68], %114 {strides = array<i32>} : memref<2x36x128xbf16, #tpu.memory_space<vmem>>, vector<1x4x128xbf16>,
      %115 = vector.extract_strided_slice %110 {offsets = [0, 128], sizes = [4, 128], strides = [1, 1]} : vector<4x256xbf16> to vector<4x128xbf16>
      %c1_69 = arith.constant 1 : index
      %c16_70 = arith.constant 16 : index
      %c0_71 = arith.constant 0 : index
      %116 = vector.load %arg10[%c1_69, %c16_70, %c0_71] : memref<2x36x128xbf16, #tpu.memory_space<vmem>>, vector<1x4x128xbf16>
      %117 = vector.shape_cast %116 : vector<1x4x128xbf16> to vector<4x128xbf16>
      %118 = vector.shape_cast %115 : vector<4x128xbf16> to vector<1x4x128xbf16>
      tpu.vector_store %arg10[%c1_69, %c16_70, %c0_71], %118 {strides = array<i32>} : memref<2x36x128xbf16, #tpu.memory_space<vmem>>, vector<1x4x128xbf16>,
      %c0_72 = arith.constant 0 : index
      %c18 = arith.constant 18 : index
      %119 = vector.load %arg9[%c0_72, %c18] : memref<4x290xf32, #tpu.memory_space<vmem>>, vector<4x256xf32>
      %cst_73 = arith.constant 0.000000e+00 : f32
      %120 = vector.shape_cast %56 : vector<1x256xi1> to vector<1x256xi1>
      %121 = vector.broadcast %120 : vector<1x256xi1> to vector<4x256xi1>
      %122 = vector.broadcast %cst_73 : f32 to vector<4x256xf32>
      %123 = arith.select %121, %119, %122 : vector<4x256xi1>, vector<4x256xf32>
      %124 = arith.truncf %123 : vector<4x256xf32> to vector<4x256xbf16>
      %125 = vector.extract_strided_slice %124 {offsets = [0, 0], sizes = [4, 128], strides = [1, 1]} : vector<4x256xbf16> to vector<4x128xbf16>
      %c0_74 = arith.constant 0 : index
      %c20 = arith.constant 20 : index
      %c0_75 = arith.constant 0 : index
      %126 = vector.load %arg10[%c0_74, %c20, %c0_75] : memref<2x36x128xbf16, #tpu.memory_space<vmem>>, vector<1x4x128xbf16>
      %127 = vector.shape_cast %126 : vector<1x4x128xbf16> to vector<4x128xbf16>
      %128 = vector.shape_cast %125 : vector<4x128xbf16> to vector<1x4x128xbf16>
      tpu.vector_store %arg10[%c0_74, %c20, %c0_75], %128 {strides = array<i32>} : memref<2x36x128xbf16, #tpu.memory_space<vmem>>, vector<1x4x128xbf16>,
      %129 = vector.extract_strided_slice %124 {offsets = [0, 128], sizes = [4, 128], strides = [1, 1]} : vector<4x256xbf16> to vector<4x128xbf16>
      %c1_76 = arith.constant 1 : index
      %c20_77 = arith.constant 20 : index
      %c0_78 = arith.constant 0 : index
      %130 = vector.load %arg10[%c1_76, %c20_77, %c0_78] : memref<2x36x128xbf16, #tpu.memory_space<vmem>>, vector<1x4x128xbf16>
      %131 = vector.shape_cast %130 : vector<1x4x128xbf16> to vector<4x128xbf16>
      %132 = vector.shape_cast %129 : vector<4x128xbf16> to vector<1x4x128xbf16>
      tpu.vector_store %arg10[%c1_76, %c20_77, %c0_78], %132 {strides = array<i32>} : memref<2x36x128xbf16, #tpu.memory_space<vmem>>, vector<1x4x128xbf16>,
      %c0_79 = arith.constant 0 : index
      %c32 = arith.constant 32 : index
      %133 = vector.load %arg9[%c0_79, %c32] : memref<4x290xf32, #tpu.memory_space<vmem>>, vector<4x256xf32>
      %cst_80 = arith.constant 0.000000e+00 : f32
      %134 = vector.shape_cast %54 : vector<1x256xi1> to vector<1x256xi1>
      %135 = vector.broadcast %134 : vector<1x256xi1> to vector<4x256xi1>
      %136 = vector.broadcast %cst_80 : f32 to vector<4x256xf32>
      %137 = arith.select %135, %133, %136 : vector<4x256xi1>, vector<4x256xf32>
      %138 = arith.truncf %137 : vector<4x256xf32> to vector<4x256xbf16>
      %139 = vector.extract_strided_slice %138 {offsets = [0, 0], sizes = [4, 128], strides = [1, 1]} : vector<4x256xbf16> to vector<4x128xbf16>
      %c0_81 = arith.constant 0 : index
      %c24 = arith.constant 24 : index
      %c0_82 = arith.constant 0 : index
      %140 = vector.load %arg10[%c0_81, %c24, %c0_82] : memref<2x36x128xbf16, #tpu.memory_space<vmem>>, vector<1x4x128xbf16>
      %141 = vector.shape_cast %140 : vector<1x4x128xbf16> to vector<4x128xbf16>
      %142 = vector.shape_cast %139 : vector<4x128xbf16> to vector<1x4x128xbf16>
      tpu.vector_store %arg10[%c0_81, %c24, %c0_82], %142 {strides = array<i32>} : memref<2x36x128xbf16, #tpu.memory_space<vmem>>, vector<1x4x128xbf16>,
      %143 = vector.extract_strided_slice %138 {offsets = [0, 128], sizes = [4, 128], strides = [1, 1]} : vector<4x256xbf16> to vector<4x128xbf16>
      %c1_83 = arith.constant 1 : index
      %c24_84 = arith.constant 24 : index
      %c0_85 = arith.constant 0 : index
      %144 = vector.load %arg10[%c1_83, %c24_84, %c0_85] : memref<2x36x128xbf16, #tpu.memory_space<vmem>>, vector<1x4x128xbf16>
      %145 = vector.shape_cast %144 : vector<1x4x128xbf16> to vector<4x128xbf16>
      %146 = vector.shape_cast %143 : vector<4x128xbf16> to vector<1x4x128xbf16>
      tpu.vector_store %arg10[%c1_83, %c24_84, %c0_85], %146 {strides = array<i32>} : memref<2x36x128xbf16, #tpu.memory_space<vmem>>, vector<1x4x128xbf16>,
      %c0_86 = arith.constant 0 : index
      %c33 = arith.constant 33 : index
      %147 = vector.load %arg9[%c0_86, %c33] : memref<4x290xf32, #tpu.memory_space<vmem>>, vector<4x256xf32>
      %148 = arith.truncf %147 : vector<4x256xf32> to vector<4x256xbf16>
      %149 = vector.extract_strided_slice %148 {offsets = [0, 0], sizes = [4, 128], strides = [1, 1]} : vector<4x256xbf16> to vector<4x128xbf16>
      %c0_87 = arith.constant 0 : index
      %c28 = arith.constant 28 : index
      %c0_88 = arith.constant 0 : index
      %150 = vector.load %arg10[%c0_87, %c28, %c0_88] : memref<2x36x128xbf16, #tpu.memory_space<vmem>>, vector<1x4x128xbf16>
      %151 = vector.shape_cast %150 : vector<1x4x128xbf16> to vector<4x128xbf16>
      %152 = vector.shape_cast %149 : vector<4x128xbf16> to vector<1x4x128xbf16>
      tpu.vector_store %arg10[%c0_87, %c28, %c0_88], %152 {strides = array<i32>} : memref<2x36x128xbf16, #tpu.memory_space<vmem>>, vector<1x4x128xbf16>,
      %153 = vector.extract_strided_slice %148 {offsets = [0, 128], sizes = [4, 128], strides = [1, 1]} : vector<4x256xbf16> to vector<4x128xbf16>
      %c1_89 = arith.constant 1 : index
      %c28_90 = arith.constant 28 : index
      %c0_91 = arith.constant 0 : index
      %154 = vector.load %arg10[%c1_89, %c28_90, %c0_91] : memref<2x36x128xbf16, #tpu.memory_space<vmem>>, vector<1x4x128xbf16>
      %155 = vector.shape_cast %154 : vector<1x4x128xbf16> to vector<4x128xbf16>
      %156 = vector.shape_cast %153 : vector<4x128xbf16> to vector<1x4x128xbf16>
      tpu.vector_store %arg10[%c1_89, %c28_90, %c0_91], %156 {strides = array<i32>} : memref<2x36x128xbf16, #tpu.memory_space<vmem>>, vector<1x4x128xbf16>,
      %c0_92 = arith.constant 0 : index
      %c34 = arith.constant 34 : index
      %157 = vector.load %arg9[%c0_92, %c34] : memref<4x290xf32, #tpu.memory_space<vmem>>, vector<4x256xf32>
      %cst_93 = arith.constant 0.000000e+00 : f32
      %158 = vector.shape_cast %56 : vector<1x256xi1> to vector<1x256xi1>
      %159 = vector.broadcast %158 : vector<1x256xi1> to vector<4x256xi1>
      %160 = vector.broadcast %cst_93 : f32 to vector<4x256xf32>
      %161 = arith.select %159, %157, %160 : vector<4x256xi1>, vector<4x256xf32>
      %162 = arith.truncf %161 : vector<4x256xf32> to vector<4x256xbf16>
      %163 = vector.extract_strided_slice %162 {offsets = [0, 0], sizes = [4, 128], strides = [1, 1]} : vector<4x256xbf16> to vector<4x128xbf16>
      %c0_94 = arith.constant 0 : index
      %c32_95 = arith.constant 32 : index
      %c0_96 = arith.constant 0 : index
      %164 = vector.load %arg10[%c0_94, %c32_95, %c0_96] : memref<2x36x128xbf16, #tpu.memory_space<vmem>>, vector<1x4x128xbf16>
      %165 = vector.shape_cast %164 : vector<1x4x128xbf16> to vector<4x128xbf16>
      %166 = vector.shape_cast %163 : vector<4x128xbf16> to vector<1x4x128xbf16>
      tpu.vector_store %arg10[%c0_94, %c32_95, %c0_96], %166 {strides = array<i32>} : memref<2x36x128xbf16, #tpu.memory_space<vmem>>, vector<1x4x128xbf16>,
      %167 = vector.extract_strided_slice %162 {offsets = [0, 128], sizes = [4, 128], strides = [1, 1]} : vector<4x256xbf16> to vector<4x128xbf16>
      %c1_97 = arith.constant 1 : index
      %c32_98 = arith.constant 32 : index
      %c0_99 = arith.constant 0 : index
      %168 = vector.load %arg10[%c1_97, %c32_98, %c0_99] : memref<2x36x128xbf16, #tpu.memory_space<vmem>>, vector<1x4x128xbf16>
      %169 = vector.shape_cast %168 : vector<1x4x128xbf16> to vector<4x128xbf16>
      %170 = vector.shape_cast %167 : vector<4x128xbf16> to vector<1x4x128xbf16>
      tpu.vector_store %arg10[%c1_97, %c32_98, %c0_99], %170 {strides = array<i32>} : memref<2x36x128xbf16, #tpu.memory_space<vmem>>, vector<1x4x128xbf16>,
    } else {
    }
    %c0 = arith.constant 0 : index
    %c0_1 = arith.constant 0 : index
    %3 = vector.load %arg5[%c0, %c0_1] : memref<4x36xbf16, #tpu.memory_space<vmem>>, vector<4x36xbf16>
    %4 = arith.index_cast %arg1 : i32 to index
    %c0_2 = arith.constant 0 : index
    %c0_3 = arith.constant 0 : index
    %5 = vector.load %arg10[%4, %c0_2, %c0_3] : memref<2x36x128xbf16, #tpu.memory_space<vmem>>, vector<1x36x128xbf16>
    %6 = vector.shape_cast %5 : vector<1x36x128xbf16> to vector<36x128xbf16>
    %cst = arith.constant dense<0.000000e+00> : vector<4x128xf32>
    %7 = tpu.matmul %3, %6, %cst {dimension_numbers = #tpu.dot_dimension_numbers<[1], [0], [0], [1], [0, 0, 1, 1], [], []>} : vector<4x36xbf16>, vector<36x128xbf16>, vector<4x128xf32> -> vector<4x128xf32>
    %c0_4 = arith.constant 0 : index
    %c0_5 = arith.constant 0 : index
    %c0_6 = arith.constant 0 : index
    %8 = vector.load %arg6[%c0_4, %c0_5, %c0_6] : memref<1x4x128xf32, #tpu.memory_space<vmem>>, vector<1x4x128xf32>
    %9 = vector.shape_cast %8 : vector<1x4x128xf32> to vector<4x128xf32>
    %10 = vector.shape_cast %7 : vector<4x128xf32> to vector<1x4x128xf32>
    tpu.vector_store %arg6[%c0_4, %c0_5, %c0_6], %10 {strides = array<i32>} : memref<1x4x128xf32, #tpu.memory_space<vmem>>, vector<1x4x128xf32>,
    %cst_7 = arith.constant dense<0.000000e+00> : vector<4xf32>
    %11 = vector.multi_reduction <add>, %7, %cst_7 [1] : vector<4x128xf32> to vector<4xf32>
    %12 = vector.shape_cast %11 : vector<4xf32> to vector<4x1xf32>
    %c0_8 = arith.constant 0 : index
    %c0_9 = arith.constant 0 : index
    %c0_10 = arith.constant 0 : index
    %c0_11 = arith.constant 0 : index
    %13 = vector.load %arg7[%c0_8, %c0_9, %c0_10, %c0_11] : memref<1x1x4x1xf32, #tpu.memory_space<vmem>>, vector<1x1x4x1xf32>
    %14 = vector.shape_cast %13 : vector<1x1x4x1xf32> to vector<4x1xf32>
    %15 = vector.shape_cast %12 : vector<4x1xf32> to vector<1x1x4x1xf32>
    tpu.vector_store %arg7[%c0_8, %c0_9, %c0_10, %c0_11], %15 {strides = array<i32>} : memref<1x1x4x1xf32, #tpu.memory_space<vmem>>, vector<1x1x4x1xf32>,
    %16 = arith.mulf %7, %7 : vector<4x128xf32>
    %cst_12 = arith.constant dense<0.000000e+00> : vector<4xf32>
    %17 = vector.multi_reduction <add>, %16, %cst_12 [1] : vector<4x128xf32> to vector<4xf32>
    %18 = vector.shape_cast %17 : vector<4xf32> to vector<4x1xf32>
    %c0_13 = arith.constant 0 : index
    %c0_14 = arith.constant 0 : index
    %c0_15 = arith.constant 0 : index
    %c0_16 = arith.constant 0 : index
    %19 = vector.load %arg8[%c0_13, %c0_14, %c0_15, %c0_16] : memref<1x1x4x1xf32, #tpu.memory_space<vmem>>, vector<1x1x4x1xf32>
    %20 = vector.shape_cast %19 : vector<1x1x4x1xf32> to vector<4x1xf32>
    %21 = vector.shape_cast %18 : vector<4x1xf32> to vector<1x1x4x1xf32>
    tpu.vector_store %arg8[%c0_13, %c0_14, %c0_15, %c0_16], %21 {strides = array<i32>} : memref<1x1x4x1xf32, #tpu.memory_space<vmem>>, vector<1x1x4x1xf32>,
    return
  }
  func.func @transform_0(%arg0: i32, %arg1: i32) -> (i32, i32, i32) {
    %c0_i32 = arith.constant 0 : i32
    %c0_i32_0 = arith.constant 0 : i32
    %c0_i32_1 = arith.constant 0 : i32
    return %arg0, %c0_i32, %c0_i32_0 : i32, i32, i32
  }
  func.func @transform_1(%arg0: i32, %arg1: i32) -> (i32, i32) {
    %c0_i32 = arith.constant 0 : i32
    %c0_i32_0 = arith.constant 0 : i32
    %c0_i32_1 = arith.constant 0 : i32
    return %c0_i32, %c0_i32_0 : i32, i32
  }
  func.func @transform_2(%arg0: i32, %arg1: i32) -> (i32, i32) {
    %c0_i32 = arith.constant 0 : i32
    %c0_i32_0 = arith.constant 0 : i32
    %c0_i32_1 = arith.constant 0 : i32
    return %c0_i32, %c0_i32_0 : i32, i32
  }
  func.func @transform_3(%arg0: i32, %arg1: i32) -> (i32, i32) {
    %c0_i32 = arith.constant 0 : i32
    %c0_i32_0 = arith.constant 0 : i32
    %c0_i32_1 = arith.constant 0 : i32
    return %c0_i32, %c0_i32_0 : i32, i32
  }
  func.func @transform_4(%arg0: i32, %arg1: i32) -> (i32, i32, i32) {
    %c0_i32 = arith.constant 0 : i32
    %c0_i32_0 = arith.constant 0 : i32
    return %arg0, %c0_i32, %arg1 : i32, i32, i32
  }
  func.func @transform_5(%arg0: i32, %arg1: i32) -> (i32, i32, i32, i32) {
    %c0_i32 = arith.constant 0 : i32
    %c0_i32_0 = arith.constant 0 : i32
    %c0_i32_1 = arith.constant 0 : i32
    return %arg0, %arg1, %c0_i32, %c0_i32_0 : i32, i32, i32, i32
  }
  func.func @transform_6(%arg0: i32, %arg1: i32) -> (i32, i32, i32, i32) {
    %c0_i32 = arith.constant 0 : i32
    %c0_i32_0 = arith.constant 0 : i32
    %c0_i32_1 = arith.constant 0 : i32
    return %arg0, %arg1, %c0_i32, %c0_i32_0 : i32, i32, i32, i32
  }
}

module attributes {stable_mosaic.version = 11 : i64} {
  func.func @kernel(%arg0: i32, %arg1: i32, %arg2: memref<1x4x256xf32, #tpu.memory_space<vmem>>, %arg3: memref<4x1xf32, #tpu.memory_space<vmem>>, %arg4: memref<4x1xf32, #tpu.memory_space<vmem>>, %arg5: memref<4x36xbf16, #tpu.memory_space<vmem>>, %arg6: memref<1x4x128xf32, #tpu.memory_space<vmem>>, %arg7: memref<4x290xf32, #tpu.memory_space<vmem>>, %arg8: memref<2x36x128xbf16, #tpu.memory_space<vmem>>) attributes {dimension_semantics = [#tpu.dimension_semantics<parallel>, #tpu.dimension_semantics<arbitrary>], iteration_bounds = array<i64: 2, 2>, scalar_prefetch = 0 : i64, scratch_operands = 2 : i64, tpu.core_type = #tpu.core_type<tc>, window_params = [{transform_indices = @transform_0, window_bounds = array<i64: 1, 4, 256>}, {pipeline_mode = #tpu.pipeline_mode<synchronous>, transform_indices = @transform_1, window_bounds = array<i64: 4, 1>}, {pipeline_mode = #tpu.pipeline_mode<synchronous>, transform_indices = @transform_2, window_bounds = array<i64: 4, 1>}, {pipeline_mode = #tpu.pipeline_mode<synchronous>, transform_indices = @transform_3, window_bounds = array<i64: 4, 36>}, {transform_indices = @transform_4, window_bounds = array<i64: 1, 4, 128>}]} {
    %c0_i32 = arith.constant 0 : i32
    %0 = arith.cmpi eq, %arg1, %c0_i32 : i32
    %1 = arith.extui %0 : i1 to i32
    %c0_i32_0 = arith.constant 0 : i32
    %2 = arith.cmpi ne, %1, %c0_i32_0 : i32
    scf.if %2 {
      %c0_7 = arith.constant 0 : index
      %c0_8 = arith.constant 0 : index
      %c0_9 = arith.constant 0 : index
      %11 = vector.load %arg2[%c0_7, %c0_8, %c0_9] : memref<1x4x256xf32, #tpu.memory_space<vmem>>, vector<1x4x256xf32>
      %12 = vector.shape_cast %11 : vector<1x4x256xf32> to vector<4x256xf32>
      %c0_10 = arith.constant 0 : index
      %c0_11 = arith.constant 0 : index
      %13 = vector.load %arg3[%c0_10, %c0_11] : memref<4x1xf32, #tpu.memory_space<vmem>>, vector<4x1xf32>
      %14 = vector.broadcast %13 : vector<4x1xf32> to vector<4x256xf32>
      %15 = arith.mulf %12, %14 : vector<4x256xf32>
      %c0_12 = arith.constant 0 : index
      %c0_13 = arith.constant 0 : index
      %16 = vector.load %arg4[%c0_12, %c0_13] : memref<4x1xf32, #tpu.memory_space<vmem>>, vector<4x1xf32>
      %17 = vector.broadcast %16 : vector<4x1xf32> to vector<4x256xf32>
      %18 = arith.addf %15, %17 : vector<4x256xf32>
      %cst_14 = arith.constant 0.000000e+00 : f32
      %19 = vector.broadcast %cst_14 : f32 to vector<4x256xf32>
      %20 = arith.maximumf %18, %19 : vector<4x256xf32>
      %c0_15 = arith.constant 0 : index
      %c17 = arith.constant 17 : index
      %21 = vector.load %arg7[%c0_15, %c17] : memref<4x290xf32, #tpu.memory_space<vmem>>, vector<4x256xf32>
      tpu.vector_store %arg7[%c0_15, %c17], %20 {strides = array<i32>} : memref<4x290xf32, #tpu.memory_space<vmem>>, vector<4x256xf32>,
      %cst_16 = arith.constant 0.000000e+00 : f32
      %22 = vector.broadcast %cst_16 : f32 to vector<4x17xf32>
      %c0_17 = arith.constant 0 : index
      %c0_18 = arith.constant 0 : index
      %23 = vector.load %arg7[%c0_17, %c0_18] : memref<4x290xf32, #tpu.memory_space<vmem>>, vector<4x17xf32>
      tpu.vector_store %arg7[%c0_17, %c0_18], %22 {strides = array<i32>} : memref<4x290xf32, #tpu.memory_space<vmem>>, vector<4x17xf32>,
      %c0_19 = arith.constant 0 : index
      %c273 = arith.constant 273 : index
      %24 = vector.load %arg7[%c0_19, %c273] : memref<4x290xf32, #tpu.memory_space<vmem>>, vector<4x17xf32>
      tpu.vector_store %arg7[%c0_19, %c273], %22 {strides = array<i32>} : memref<4x290xf32, #tpu.memory_space<vmem>>, vector<4x17xf32>,
      %25 = tpu.iota {dimensions = array<i32: 1>} : vector<1x256xi32>
      %c16_i32 = arith.constant 16 : i32
      %c0_i32_20 = arith.constant 0 : i32
      %26 = arith.cmpi eq, %c16_i32, %c0_i32_20 : i32
      %c1_i32 = arith.constant 1 : i32
      %27 = arith.select %26, %c1_i32, %c16_i32 : i32
      %28 = vector.broadcast %27 : i32 to vector<1x256xi32>
      %29 = arith.remsi %25, %28 : vector<1x256xi32>
      %c0_i32_21 = arith.constant 0 : i32
      %30 = vector.broadcast %c0_i32_21 : i32 to vector<1x256xi32>
      %31 = arith.cmpi ne, %29, %30 : vector<1x256xi32>
      %c0_i32_22 = arith.constant 0 : i32
      %32 = vector.broadcast %c0_i32_22 : i32 to vector<1x256xi32>
      %33 = arith.cmpi slt, %29, %32 : vector<1x256xi32>
      %c0_i32_23 = arith.constant 0 : i32
      %34 = arith.cmpi slt, %27, %c0_i32_23 : i32
      %35 = vector.broadcast %34 : i1 to vector<1x256xi1>
      %36 = vector.broadcast %35 : vector<1x256xi1> to vector<1x256xi1>
      %37 = arith.xori %33, %36 : vector<1x256xi1>
      %38 = arith.andi %37, %31 : vector<1x256xi1>
      %39 = vector.broadcast %27 : i32 to vector<1x256xi32>
      %40 = arith.addi %29, %39 : vector<1x256xi32>
      %41 = arith.select %38, %40, %29 : vector<1x256xi1>, vector<1x256xi32>
      %c0_i32_24 = arith.constant 0 : i32
      %42 = vector.broadcast %c0_i32_24 : i32 to vector<1x256xi32>
      %43 = arith.cmpi sgt, %41, %42 : vector<1x256xi32>
      %c15_i32 = arith.constant 15 : i32
      %44 = vector.broadcast %c15_i32 : i32 to vector<1x256xi32>
      %45 = arith.cmpi slt, %41, %44 : vector<1x256xi32>
      %c0_25 = arith.constant 0 : index
      %c0_26 = arith.constant 0 : index
      %46 = vector.load %arg7[%c0_25, %c0_26] : memref<4x290xf32, #tpu.memory_space<vmem>>, vector<4x256xf32>
      %cst_27 = arith.constant 0.000000e+00 : f32
      %47 = vector.shape_cast %43 : vector<1x256xi1> to vector<1x256xi1>
      %48 = vector.broadcast %47 : vector<1x256xi1> to vector<4x256xi1>
      %49 = vector.broadcast %cst_27 : f32 to vector<4x256xf32>
      %50 = arith.select %48, %46, %49 : vector<4x256xi1>, vector<4x256xf32>
      %51 = arith.truncf %50 : vector<4x256xf32> to vector<4x256xbf16>
      %52 = vector.extract_strided_slice %51 {offsets = [0, 0], sizes = [4, 128], strides = [1, 1]} : vector<4x256xbf16> to vector<4x128xbf16>
      %c0_28 = arith.constant 0 : index
      %c0_29 = arith.constant 0 : index
      %c0_30 = arith.constant 0 : index
      %53 = vector.load %arg8[%c0_28, %c0_29, %c0_30] : memref<2x36x128xbf16, #tpu.memory_space<vmem>>, vector<1x4x128xbf16>
      %54 = vector.shape_cast %53 : vector<1x4x128xbf16> to vector<4x128xbf16>
      %55 = vector.shape_cast %52 : vector<4x128xbf16> to vector<1x4x128xbf16>
      tpu.vector_store %arg8[%c0_28, %c0_29, %c0_30], %55 {strides = array<i32>} : memref<2x36x128xbf16, #tpu.memory_space<vmem>>, vector<1x4x128xbf16>,
      %56 = vector.extract_strided_slice %51 {offsets = [0, 128], sizes = [4, 128], strides = [1, 1]} : vector<4x256xbf16> to vector<4x128xbf16>
      %c1 = arith.constant 1 : index
      %c0_31 = arith.constant 0 : index
      %c0_32 = arith.constant 0 : index
      %57 = vector.load %arg8[%c1, %c0_31, %c0_32] : memref<2x36x128xbf16, #tpu.memory_space<vmem>>, vector<1x4x128xbf16>
      %58 = vector.shape_cast %57 : vector<1x4x128xbf16> to vector<4x128xbf16>
      %59 = vector.shape_cast %56 : vector<4x128xbf16> to vector<1x4x128xbf16>
      tpu.vector_store %arg8[%c1, %c0_31, %c0_32], %59 {strides = array<i32>} : memref<2x36x128xbf16, #tpu.memory_space<vmem>>, vector<1x4x128xbf16>,
      %c0_33 = arith.constant 0 : index
      %c1_34 = arith.constant 1 : index
      %60 = vector.load %arg7[%c0_33, %c1_34] : memref<4x290xf32, #tpu.memory_space<vmem>>, vector<4x256xf32>
      %61 = arith.truncf %60 : vector<4x256xf32> to vector<4x256xbf16>
      %62 = vector.extract_strided_slice %61 {offsets = [0, 0], sizes = [4, 128], strides = [1, 1]} : vector<4x256xbf16> to vector<4x128xbf16>
      %c0_35 = arith.constant 0 : index
      %c4 = arith.constant 4 : index
      %c0_36 = arith.constant 0 : index
      %63 = vector.load %arg8[%c0_35, %c4, %c0_36] : memref<2x36x128xbf16, #tpu.memory_space<vmem>>, vector<1x4x128xbf16>
      %64 = vector.shape_cast %63 : vector<1x4x128xbf16> to vector<4x128xbf16>
      %65 = vector.shape_cast %62 : vector<4x128xbf16> to vector<1x4x128xbf16>
      tpu.vector_store %arg8[%c0_35, %c4, %c0_36], %65 {strides = array<i32>} : memref<2x36x128xbf16, #tpu.memory_space<vmem>>, vector<1x4x128xbf16>,
      %66 = vector.extract_strided_slice %61 {offsets = [0, 128], sizes = [4, 128], strides = [1, 1]} : vector<4x256xbf16> to vector<4x128xbf16>
      %c1_37 = arith.constant 1 : index
      %c4_38 = arith.constant 4 : index
      %c0_39 = arith.constant 0 : index
      %67 = vector.load %arg8[%c1_37, %c4_38, %c0_39] : memref<2x36x128xbf16, #tpu.memory_space<vmem>>, vector<1x4x128xbf16>
      %68 = vector.shape_cast %67 : vector<1x4x128xbf16> to vector<4x128xbf16>
      %69 = vector.shape_cast %66 : vector<4x128xbf16> to vector<1x4x128xbf16>
      tpu.vector_store %arg8[%c1_37, %c4_38, %c0_39], %69 {strides = array<i32>} : memref<2x36x128xbf16, #tpu.memory_space<vmem>>, vector<1x4x128xbf16>,
      %c0_40 = arith.constant 0 : index
      %c2 = arith.constant 2 : index
      %70 = vector.load %arg7[%c0_40, %c2] : memref<4x290xf32, #tpu.memory_space<vmem>>, vector<4x256xf32>
      %cst_41 = arith.constant 0.000000e+00 : f32
      %71 = vector.shape_cast %45 : vector<1x256xi1> to vector<1x256xi1>
      %72 = vector.broadcast %71 : vector<1x256xi1> to vector<4x256xi1>
      %73 = vector.broadcast %cst_41 : f32 to vector<4x256xf32>
      %74 = arith.select %72, %70, %73 : vector<4x256xi1>, vector<4x256xf32>
      %75 = arith.truncf %74 : vector<4x256xf32> to vector<4x256xbf16>
      %76 = vector.extract_strided_slice %75 {offsets = [0, 0], sizes = [4, 128], strides = [1, 1]} : vector<4x256xbf16> to vector<4x128xbf16>
      %c0_42 = arith.constant 0 : index
      %c8 = arith.constant 8 : index
      %c0_43 = arith.constant 0 : index
      %77 = vector.load %arg8[%c0_42, %c8, %c0_43] : memref<2x36x128xbf16, #tpu.memory_space<vmem>>, vector<1x4x128xbf16>
      %78 = vector.shape_cast %77 : vector<1x4x128xbf16> to vector<4x128xbf16>
      %79 = vector.shape_cast %76 : vector<4x128xbf16> to vector<1x4x128xbf16>
      tpu.vector_store %arg8[%c0_42, %c8, %c0_43], %79 {strides = array<i32>} : memref<2x36x128xbf16, #tpu.memory_space<vmem>>, vector<1x4x128xbf16>,
      %80 = vector.extract_strided_slice %75 {offsets = [0, 128], sizes = [4, 128], strides = [1, 1]} : vector<4x256xbf16> to vector<4x128xbf16>
      %c1_44 = arith.constant 1 : index
      %c8_45 = arith.constant 8 : index
      %c0_46 = arith.constant 0 : index
      %81 = vector.load %arg8[%c1_44, %c8_45, %c0_46] : memref<2x36x128xbf16, #tpu.memory_space<vmem>>, vector<1x4x128xbf16>
      %82 = vector.shape_cast %81 : vector<1x4x128xbf16> to vector<4x128xbf16>
      %83 = vector.shape_cast %80 : vector<4x128xbf16> to vector<1x4x128xbf16>
      tpu.vector_store %arg8[%c1_44, %c8_45, %c0_46], %83 {strides = array<i32>} : memref<2x36x128xbf16, #tpu.memory_space<vmem>>, vector<1x4x128xbf16>,
      %c0_47 = arith.constant 0 : index
      %c16 = arith.constant 16 : index
      %84 = vector.load %arg7[%c0_47, %c16] : memref<4x290xf32, #tpu.memory_space<vmem>>, vector<4x256xf32>
      %cst_48 = arith.constant 0.000000e+00 : f32
      %85 = vector.shape_cast %43 : vector<1x256xi1> to vector<1x256xi1>
      %86 = vector.broadcast %85 : vector<1x256xi1> to vector<4x256xi1>
      %87 = vector.broadcast %cst_48 : f32 to vector<4x256xf32>
      %88 = arith.select %86, %84, %87 : vector<4x256xi1>, vector<4x256xf32>
      %89 = arith.truncf %88 : vector<4x256xf32> to vector<4x256xbf16>
      %90 = vector.extract_strided_slice %89 {offsets = [0, 0], sizes = [4, 128], strides = [1, 1]} : vector<4x256xbf16> to vector<4x128xbf16>
      %c0_49 = arith.constant 0 : index
      %c12 = arith.constant 12 : index
      %c0_50 = arith.constant 0 : index
      %91 = vector.load %arg8[%c0_49, %c12, %c0_50] : memref<2x36x128xbf16, #tpu.memory_space<vmem>>, vector<1x4x128xbf16>
      %92 = vector.shape_cast %91 : vector<1x4x128xbf16> to vector<4x128xbf16>
      %93 = vector.shape_cast %90 : vector<4x128xbf16> to vector<1x4x128xbf16>
      tpu.vector_store %arg8[%c0_49, %c12, %c0_50], %93 {strides = array<i32>} : memref<2x36x128xbf16, #tpu.memory_space<vmem>>, vector<1x4x128xbf16>,
      %94 = vector.extract_strided_slice %89 {offsets = [0, 128], sizes = [4, 128], strides = [1, 1]} : vector<4x256xbf16> to vector<4x128xbf16>
      %c1_51 = arith.constant 1 : index
      %c12_52 = arith.constant 12 : index
      %c0_53 = arith.constant 0 : index
      %95 = vector.load %arg8[%c1_51, %c12_52, %c0_53] : memref<2x36x128xbf16, #tpu.memory_space<vmem>>, vector<1x4x128xbf16>
      %96 = vector.shape_cast %95 : vector<1x4x128xbf16> to vector<4x128xbf16>
      %97 = vector.shape_cast %94 : vector<4x128xbf16> to vector<1x4x128xbf16>
      tpu.vector_store %arg8[%c1_51, %c12_52, %c0_53], %97 {strides = array<i32>} : memref<2x36x128xbf16, #tpu.memory_space<vmem>>, vector<1x4x128xbf16>,
      %c0_54 = arith.constant 0 : index
      %c17_55 = arith.constant 17 : index
      %98 = vector.load %arg7[%c0_54, %c17_55] : memref<4x290xf32, #tpu.memory_space<vmem>>, vector<4x256xf32>
      %99 = arith.truncf %98 : vector<4x256xf32> to vector<4x256xbf16>
      %100 = vector.extract_strided_slice %99 {offsets = [0, 0], sizes = [4, 128], strides = [1, 1]} : vector<4x256xbf16> to vector<4x128xbf16>
      %c0_56 = arith.constant 0 : index
      %c16_57 = arith.constant 16 : index
      %c0_58 = arith.constant 0 : index
      %101 = vector.load %arg8[%c0_56, %c16_57, %c0_58] : memref<2x36x128xbf16, #tpu.memory_space<vmem>>, vector<1x4x128xbf16>
      %102 = vector.shape_cast %101 : vector<1x4x128xbf16> to vector<4x128xbf16>
      %103 = vector.shape_cast %100 : vector<4x128xbf16> to vector<1x4x128xbf16>
      tpu.vector_store %arg8[%c0_56, %c16_57, %c0_58], %103 {strides = array<i32>} : memref<2x36x128xbf16, #tpu.memory_space<vmem>>, vector<1x4x128xbf16>,
      %104 = vector.extract_strided_slice %99 {offsets = [0, 128], sizes = [4, 128], strides = [1, 1]} : vector<4x256xbf16> to vector<4x128xbf16>
      %c1_59 = arith.constant 1 : index
      %c16_60 = arith.constant 16 : index
      %c0_61 = arith.constant 0 : index
      %105 = vector.load %arg8[%c1_59, %c16_60, %c0_61] : memref<2x36x128xbf16, #tpu.memory_space<vmem>>, vector<1x4x128xbf16>
      %106 = vector.shape_cast %105 : vector<1x4x128xbf16> to vector<4x128xbf16>
      %107 = vector.shape_cast %104 : vector<4x128xbf16> to vector<1x4x128xbf16>
      tpu.vector_store %arg8[%c1_59, %c16_60, %c0_61], %107 {strides = array<i32>} : memref<2x36x128xbf16, #tpu.memory_space<vmem>>, vector<1x4x128xbf16>,
      %c0_62 = arith.constant 0 : index
      %c18 = arith.constant 18 : index
      %108 = vector.load %arg7[%c0_62, %c18] : memref<4x290xf32, #tpu.memory_space<vmem>>, vector<4x256xf32>
      %cst_63 = arith.constant 0.000000e+00 : f32
      %109 = vector.shape_cast %45 : vector<1x256xi1> to vector<1x256xi1>
      %110 = vector.broadcast %109 : vector<1x256xi1> to vector<4x256xi1>
      %111 = vector.broadcast %cst_63 : f32 to vector<4x256xf32>
      %112 = arith.select %110, %108, %111 : vector<4x256xi1>, vector<4x256xf32>
      %113 = arith.truncf %112 : vector<4x256xf32> to vector<4x256xbf16>
      %114 = vector.extract_strided_slice %113 {offsets = [0, 0], sizes = [4, 128], strides = [1, 1]} : vector<4x256xbf16> to vector<4x128xbf16>
      %c0_64 = arith.constant 0 : index
      %c20 = arith.constant 20 : index
      %c0_65 = arith.constant 0 : index
      %115 = vector.load %arg8[%c0_64, %c20, %c0_65] : memref<2x36x128xbf16, #tpu.memory_space<vmem>>, vector<1x4x128xbf16>
      %116 = vector.shape_cast %115 : vector<1x4x128xbf16> to vector<4x128xbf16>
      %117 = vector.shape_cast %114 : vector<4x128xbf16> to vector<1x4x128xbf16>
      tpu.vector_store %arg8[%c0_64, %c20, %c0_65], %117 {strides = array<i32>} : memref<2x36x128xbf16, #tpu.memory_space<vmem>>, vector<1x4x128xbf16>,
      %118 = vector.extract_strided_slice %113 {offsets = [0, 128], sizes = [4, 128], strides = [1, 1]} : vector<4x256xbf16> to vector<4x128xbf16>
      %c1_66 = arith.constant 1 : index
      %c20_67 = arith.constant 20 : index
      %c0_68 = arith.constant 0 : index
      %119 = vector.load %arg8[%c1_66, %c20_67, %c0_68] : memref<2x36x128xbf16, #tpu.memory_space<vmem>>, vector<1x4x128xbf16>
      %120 = vector.shape_cast %119 : vector<1x4x128xbf16> to vector<4x128xbf16>
      %121 = vector.shape_cast %118 : vector<4x128xbf16> to vector<1x4x128xbf16>
      tpu.vector_store %arg8[%c1_66, %c20_67, %c0_68], %121 {strides = array<i32>} : memref<2x36x128xbf16, #tpu.memory_space<vmem>>, vector<1x4x128xbf16>,
      %c0_69 = arith.constant 0 : index
      %c32 = arith.constant 32 : index
      %122 = vector.load %arg7[%c0_69, %c32] : memref<4x290xf32, #tpu.memory_space<vmem>>, vector<4x256xf32>
      %cst_70 = arith.constant 0.000000e+00 : f32
      %123 = vector.shape_cast %43 : vector<1x256xi1> to vector<1x256xi1>
      %124 = vector.broadcast %123 : vector<1x256xi1> to vector<4x256xi1>
      %125 = vector.broadcast %cst_70 : f32 to vector<4x256xf32>
      %126 = arith.select %124, %122, %125 : vector<4x256xi1>, vector<4x256xf32>
      %127 = arith.truncf %126 : vector<4x256xf32> to vector<4x256xbf16>
      %128 = vector.extract_strided_slice %127 {offsets = [0, 0], sizes = [4, 128], strides = [1, 1]} : vector<4x256xbf16> to vector<4x128xbf16>
      %c0_71 = arith.constant 0 : index
      %c24 = arith.constant 24 : index
      %c0_72 = arith.constant 0 : index
      %129 = vector.load %arg8[%c0_71, %c24, %c0_72] : memref<2x36x128xbf16, #tpu.memory_space<vmem>>, vector<1x4x128xbf16>
      %130 = vector.shape_cast %129 : vector<1x4x128xbf16> to vector<4x128xbf16>
      %131 = vector.shape_cast %128 : vector<4x128xbf16> to vector<1x4x128xbf16>
      tpu.vector_store %arg8[%c0_71, %c24, %c0_72], %131 {strides = array<i32>} : memref<2x36x128xbf16, #tpu.memory_space<vmem>>, vector<1x4x128xbf16>,
      %132 = vector.extract_strided_slice %127 {offsets = [0, 128], sizes = [4, 128], strides = [1, 1]} : vector<4x256xbf16> to vector<4x128xbf16>
      %c1_73 = arith.constant 1 : index
      %c24_74 = arith.constant 24 : index
      %c0_75 = arith.constant 0 : index
      %133 = vector.load %arg8[%c1_73, %c24_74, %c0_75] : memref<2x36x128xbf16, #tpu.memory_space<vmem>>, vector<1x4x128xbf16>
      %134 = vector.shape_cast %133 : vector<1x4x128xbf16> to vector<4x128xbf16>
      %135 = vector.shape_cast %132 : vector<4x128xbf16> to vector<1x4x128xbf16>
      tpu.vector_store %arg8[%c1_73, %c24_74, %c0_75], %135 {strides = array<i32>} : memref<2x36x128xbf16, #tpu.memory_space<vmem>>, vector<1x4x128xbf16>,
      %c0_76 = arith.constant 0 : index
      %c33 = arith.constant 33 : index
      %136 = vector.load %arg7[%c0_76, %c33] : memref<4x290xf32, #tpu.memory_space<vmem>>, vector<4x256xf32>
      %137 = arith.truncf %136 : vector<4x256xf32> to vector<4x256xbf16>
      %138 = vector.extract_strided_slice %137 {offsets = [0, 0], sizes = [4, 128], strides = [1, 1]} : vector<4x256xbf16> to vector<4x128xbf16>
      %c0_77 = arith.constant 0 : index
      %c28 = arith.constant 28 : index
      %c0_78 = arith.constant 0 : index
      %139 = vector.load %arg8[%c0_77, %c28, %c0_78] : memref<2x36x128xbf16, #tpu.memory_space<vmem>>, vector<1x4x128xbf16>
      %140 = vector.shape_cast %139 : vector<1x4x128xbf16> to vector<4x128xbf16>
      %141 = vector.shape_cast %138 : vector<4x128xbf16> to vector<1x4x128xbf16>
      tpu.vector_store %arg8[%c0_77, %c28, %c0_78], %141 {strides = array<i32>} : memref<2x36x128xbf16, #tpu.memory_space<vmem>>, vector<1x4x128xbf16>,
      %142 = vector.extract_strided_slice %137 {offsets = [0, 128], sizes = [4, 128], strides = [1, 1]} : vector<4x256xbf16> to vector<4x128xbf16>
      %c1_79 = arith.constant 1 : index
      %c28_80 = arith.constant 28 : index
      %c0_81 = arith.constant 0 : index
      %143 = vector.load %arg8[%c1_79, %c28_80, %c0_81] : memref<2x36x128xbf16, #tpu.memory_space<vmem>>, vector<1x4x128xbf16>
      %144 = vector.shape_cast %143 : vector<1x4x128xbf16> to vector<4x128xbf16>
      %145 = vector.shape_cast %142 : vector<4x128xbf16> to vector<1x4x128xbf16>
      tpu.vector_store %arg8[%c1_79, %c28_80, %c0_81], %145 {strides = array<i32>} : memref<2x36x128xbf16, #tpu.memory_space<vmem>>, vector<1x4x128xbf16>,
      %c0_82 = arith.constant 0 : index
      %c34 = arith.constant 34 : index
      %146 = vector.load %arg7[%c0_82, %c34] : memref<4x290xf32, #tpu.memory_space<vmem>>, vector<4x256xf32>
      %cst_83 = arith.constant 0.000000e+00 : f32
      %147 = vector.shape_cast %45 : vector<1x256xi1> to vector<1x256xi1>
      %148 = vector.broadcast %147 : vector<1x256xi1> to vector<4x256xi1>
      %149 = vector.broadcast %cst_83 : f32 to vector<4x256xf32>
      %150 = arith.select %148, %146, %149 : vector<4x256xi1>, vector<4x256xf32>
      %151 = arith.truncf %150 : vector<4x256xf32> to vector<4x256xbf16>
      %152 = vector.extract_strided_slice %151 {offsets = [0, 0], sizes = [4, 128], strides = [1, 1]} : vector<4x256xbf16> to vector<4x128xbf16>
      %c0_84 = arith.constant 0 : index
      %c32_85 = arith.constant 32 : index
      %c0_86 = arith.constant 0 : index
      %153 = vector.load %arg8[%c0_84, %c32_85, %c0_86] : memref<2x36x128xbf16, #tpu.memory_space<vmem>>, vector<1x4x128xbf16>
      %154 = vector.shape_cast %153 : vector<1x4x128xbf16> to vector<4x128xbf16>
      %155 = vector.shape_cast %152 : vector<4x128xbf16> to vector<1x4x128xbf16>
      tpu.vector_store %arg8[%c0_84, %c32_85, %c0_86], %155 {strides = array<i32>} : memref<2x36x128xbf16, #tpu.memory_space<vmem>>, vector<1x4x128xbf16>,
      %156 = vector.extract_strided_slice %151 {offsets = [0, 128], sizes = [4, 128], strides = [1, 1]} : vector<4x256xbf16> to vector<4x128xbf16>
      %c1_87 = arith.constant 1 : index
      %c32_88 = arith.constant 32 : index
      %c0_89 = arith.constant 0 : index
      %157 = vector.load %arg8[%c1_87, %c32_88, %c0_89] : memref<2x36x128xbf16, #tpu.memory_space<vmem>>, vector<1x4x128xbf16>
      %158 = vector.shape_cast %157 : vector<1x4x128xbf16> to vector<4x128xbf16>
      %159 = vector.shape_cast %156 : vector<4x128xbf16> to vector<1x4x128xbf16>
      tpu.vector_store %arg8[%c1_87, %c32_88, %c0_89], %159 {strides = array<i32>} : memref<2x36x128xbf16, #tpu.memory_space<vmem>>, vector<1x4x128xbf16>,
    } else {
    }
    %c0 = arith.constant 0 : index
    %c0_1 = arith.constant 0 : index
    %3 = vector.load %arg5[%c0, %c0_1] : memref<4x36xbf16, #tpu.memory_space<vmem>>, vector<4x36xbf16>
    %4 = arith.index_cast %arg1 : i32 to index
    %c0_2 = arith.constant 0 : index
    %c0_3 = arith.constant 0 : index
    %5 = vector.load %arg8[%4, %c0_2, %c0_3] : memref<2x36x128xbf16, #tpu.memory_space<vmem>>, vector<1x36x128xbf16>
    %6 = vector.shape_cast %5 : vector<1x36x128xbf16> to vector<36x128xbf16>
    %cst = arith.constant dense<0.000000e+00> : vector<4x128xf32>
    %7 = tpu.matmul %3, %6, %cst {dimension_numbers = #tpu.dot_dimension_numbers<[1], [0], [0], [1], [0, 0, 1, 1], [], []>} : vector<4x36xbf16>, vector<36x128xbf16>, vector<4x128xf32> -> vector<4x128xf32>
    %c0_4 = arith.constant 0 : index
    %c0_5 = arith.constant 0 : index
    %c0_6 = arith.constant 0 : index
    %8 = vector.load %arg6[%c0_4, %c0_5, %c0_6] : memref<1x4x128xf32, #tpu.memory_space<vmem>>, vector<1x4x128xf32>
    %9 = vector.shape_cast %8 : vector<1x4x128xf32> to vector<4x128xf32>
    %10 = vector.shape_cast %7 : vector<4x128xf32> to vector<1x4x128xf32>
    tpu.vector_store %arg6[%c0_4, %c0_5, %c0_6], %10 {strides = array<i32>} : memref<1x4x128xf32, #tpu.memory_space<vmem>>, vector<1x4x128xf32>,
    return
  }
  func.func @transform_0(%arg0: i32, %arg1: i32) -> (i32, i32, i32) {
    %c0_i32 = arith.constant 0 : i32
    %c0_i32_0 = arith.constant 0 : i32
    %c0_i32_1 = arith.constant 0 : i32
    return %arg0, %c0_i32, %c0_i32_0 : i32, i32, i32
  }
  func.func @transform_1(%arg0: i32, %arg1: i32) -> (i32, i32) {
    %c0_i32 = arith.constant 0 : i32
    %c0_i32_0 = arith.constant 0 : i32
    %c0_i32_1 = arith.constant 0 : i32
    return %c0_i32, %c0_i32_0 : i32, i32
  }
  func.func @transform_2(%arg0: i32, %arg1: i32) -> (i32, i32) {
    %c0_i32 = arith.constant 0 : i32
    %c0_i32_0 = arith.constant 0 : i32
    %c0_i32_1 = arith.constant 0 : i32
    return %c0_i32, %c0_i32_0 : i32, i32
  }
  func.func @transform_3(%arg0: i32, %arg1: i32) -> (i32, i32) {
    %c0_i32 = arith.constant 0 : i32
    %c0_i32_0 = arith.constant 0 : i32
    %c0_i32_1 = arith.constant 0 : i32
    return %c0_i32, %c0_i32_0 : i32, i32
  }
  func.func @transform_4(%arg0: i32, %arg1: i32) -> (i32, i32, i32) {
    %c0_i32 = arith.constant 0 : i32
    %c0_i32_0 = arith.constant 0 : i32
    return %arg0, %c0_i32, %arg1 : i32, i32, i32
  }
}

</mosaic_0001>

<llo_original>
// kernel: basic_block_forward.2
$region0: #{basic_block_forward.2}
  #allocation0 [shape = 'u32[]', space=smem, size = 0x4, offset = 0x4, fixed_abs, tag = 'smem constant byte address 0x4 - core index']
  #allocation1 [shape = 'u32[144,128]{1,0:T(1,128)}', space=vmem, size = 0x12000, scoped, tag = 'internal scratch']
  #allocation2 [shape = 'f32[4,290]{1,0:T(4,128)}', space=vmem, size = 0x1800, scoped, tag = 'scratch operand']
  #allocation3 [shape = 'bf16[2,36,128]{2,1,0:T(8,128)(2,1)}', space=vmem, size = 0x5000, scoped, tag = 'scratch operand']
  %s0 = inlined_call_operand.vmem [shape: f32[2,4,256], index: 0, kind: input, shape index: {}]
  %s1 = inlined_call_operand.vmem [shape: f32[4,1], index: 1, kind: input, shape index: {}]
  %s2 = inlined_call_operand.vmem [shape: f32[4,1], index: 2, kind: input, shape index: {}]
  %s3 = inlined_call_operand.vmem [shape: bf16[4,36], index: 3, kind: input, shape index: {}]
  %s4 = inlined_call_operand.vmem [shape: f32[2,4,256], index: 4, kind: output, shape index: {0}]
  %s5 = inlined_call_operand.vmem [shape: f32[2,2,4,1], index: 5, kind: output, shape index: {1}]
  %s6 = inlined_call_operand.vmem [shape: f32[2,2,4,1], index: 6, kind: output, shape index: {2}]
  %7 = xla_tuple %s4, %s5, %s6
  %s8 = sld [smem:[#allocation0]]
  $region69: #{basic_block_forward.2} parent=0
    _
  %s10 = ssub.s32 1, %s8
  %s11 = scalar_select 0, %s10, %s8
  loop: start=0, step=1, limit=6
  $region2: #{basic_block_forward.2} parent=0 // loop_pre_header
    _
  $region3: #{basic_block_forward.2} parent=0 // loop_header
    %s13 = sphi 0, %s17
    %p14 = scmp.ge.s32.totalorder %s13, 6
    %s20 = sphi 0, %s32
    %s21 = sphi 0, %s28
    %s22 = sphi 0, %s20
    %s23 = sphi 0, %s21
    %s24 = sphi 0, %s22
    %s25 = sphi 0, %s23
    %s35 = sphi 0, %s37
    %s38 = sphi 0, %s35
    %s39 = sphi 0, %s38
    %s55 = sphi 0, %s39
    %s59 = sphi 0, %s59
    %s61 = sphi 0, %s59
    %s62 = sphi 0, %s61
    %s76 = sphi 0, %s62
    %s80 = sphi 0, %s80
    %s82 = sphi 0, %s80
    %s83 = sphi 0, %s82
    %s97 = sphi 0, %s83
    %s101 = sphi 0, %s101
    %s103 = sphi 0, %s101
    %s104 = sphi 0, %s103
    %s118 = sphi 0, %s104
    %s126 = sphi 0, %s128
    %s129 = sphi 0, %s126
    %s130 = sphi 0, %s129
    %s146 = sphi 0, %s130
    %s154 = sphi 0, %s156
    %s157 = sphi 0, %s154
    %s158 = sphi 0, %s157
    %s174 = sphi 0, %s158
    %s182 = sphi 0, %s184
    %s185 = sphi 0, %s182
    %s186 = sphi 0, %s185
    %s202 = sphi 0, %s186
  $region4: #{basic_block_forward.2} parent=0 // loop_header_branch
    %16 = sbr.rel (%p14) target = $region8
  $region5: #{basic_block_forward.2} parent=0 // loop_body
    %s18 = ssub.s32 %s13, 1
    %s19 = ssub.s32 %s13, 2
    %s26 = sadd.s32 1, %s21
    %p27 = scmp.ge.s32.totalorder %s26, 2
    %s28 = scalar_select %p27, 0, %s26
    %s29 = sadd.s32 1, %s20
    %s30 = scalar_select %p27, %s29, %s20
    %p31 = scmp.ge.s32.totalorder %s30, 2
    %s32 = scalar_select %p31, 0, %s30
    %s33 = ssub.s32 %s20, %s32
    %p34 = scmp.eq.s32.totalorder %s33, 0
    %s36 = sadd.s32 %s35, 1
    %s37 = scalar_select %p34, %s35, %s36
    %p40 = pneg %p34
    %p41 = scmp.eq.s32.totalorder %s13, 3
    %p42 = por %p40, %p41
    %p43 = scmp.ne.s32.totalorder %s35, %s38
    %p44 = scmp.eq.s32.totalorder %s13, 0
    %p45 = por %p43, %p44
    %p46 = scmp.ne.s32.totalorder %s35, %s38
    %p47 = scmp.eq.s32.totalorder %s18, 3
    %p48 = por %p46, %p47
    %p49 = scmp.ne.s32.totalorder %s38, %s39
    %p50 = scmp.eq.s32.totalorder %s18, 0
    %p51 = por %p49, %p50
    %p52 = scmp.ne.s32.totalorder %s38, %s39
    %p53 = scmp.eq.s32.totalorder %s19, 3
    %p54 = por %p52, %p53
    %p56 = scmp.ne.s32.totalorder %s39, %s55
    %p57 = scmp.eq.s32.totalorder %s19, 0
    %p58 = por %p56, %p57
    %s60 = sadd.s32 %s59, 1
    %p63 = scmp.eq.s32.totalorder %s13, 3
    %p64 = scmp.ne.s32.totalorder %s59, %s61
    %p65 = scmp.eq.s32.totalorder %s13, 0
    %p66 = por %p64, %p65
    %p67 = scmp.ne.s32.totalorder %s59, %s61
    %p68 = scmp.eq.s32.totalorder %s18, 3
    %p69 = por %p67, %p68
    %p70 = scmp.ne.s32.totalorder %s61, %s62
    %p71 = scmp.eq.s32.totalorder %s18, 0
    %p72 = por %p70, %p71
    %p73 = scmp.ne.s32.totalorder %s61, %s62
    %p74 = scmp.eq.s32.totalorder %s19, 3
    %p75 = por %p73, %p74
    %p77 = scmp.ne.s32.totalorder %s62, %s76
    %p78 = scmp.eq.s32.totalorder %s19, 0
    %p79 = por %p77, %p78
    %s81 = sadd.s32 %s80, 1
    %p84 = scmp.eq.s32.totalorder %s13, 3
    %p85 = scmp.ne.s32.totalorder %s80, %s82
    %p86 = scmp.eq.s32.totalorder %s13, 0
    %p87 = por %p85, %p86
    %p88 = scmp.ne.s32.totalorder %s80, %s82
    %p89 = scmp.eq.s32.totalorder %s18, 3
    %p90 = por %p88, %p89
    %p91 = scmp.ne.s32.totalorder %s82, %s83
    %p92 = scmp.eq.s32.totalorder %s18, 0
    %p93 = por %p91, %p92
    %p94 = scmp.ne.s32.totalorder %s82, %s83
    %p95 = scmp.eq.s32.totalorder %s19, 3
    %p96 = por %p94, %p95
    %p98 = scmp.ne.s32.totalorder %s83, %s97
    %p99 = scmp.eq.s32.totalorder %s19, 0
    %p100 = por %p98, %p99
    %s102 = sadd.s32 %s101, 1
    %p105 = scmp.eq.s32.totalorder %s13, 3
    %p106 = scmp.ne.s32.totalorder %s101, %s103
    %p107 = scmp.eq.s32.totalorder %s13, 0
    %p108 = por %p106, %p107
    %p109 = scmp.ne.s32.totalorder %s101, %s103
    %p110 = scmp.eq.s32.totalorder %s18, 3
    %p111 = por %p109, %p110
    %p112 = scmp.ne.s32.totalorder %s103, %s104
    %p113 = scmp.eq.s32.totalorder %s18, 0
    %p114 = por %p112, %p113
    %p115 = scmp.ne.s32.totalorder %s103, %s104
    %p116 = scmp.eq.s32.totalorder %s19, 3
    %p117 = por %p115, %p116
    %p119 = scmp.ne.s32.totalorder %s104, %s118
    %p120 = scmp.eq.s32.totalorder %s19, 0
    %p121 = por %p119, %p120
    %s122 = ssub.s32 %s20, %s32
    %s123 = ssub.s32 %s21, %s28
    %s124 = sor.u32 %s122, %s123
    %p125 = scmp.eq.s32.totalorder %s124, 0
    %s127 = sadd.s32 %s126, 1
    %s128 = scalar_select %p125, %s126, %s127
    %p131 = pneg %p125
    %p132 = scmp.eq.s32.totalorder %s13, 3
    %p133 = por %p131, %p132
    %p134 = scmp.ne.s32.totalorder %s126, %s129
    %p135 = scmp.eq.s32.totalorder %s13, 0
    %p136 = por %p134, %p135
    %p137 = scmp.ne.s32.totalorder %s126, %s129
    %p138 = scmp.eq.s32.totalorder %s18, 3
    %p139 = por %p137, %p138
    %p140 = scmp.ne.s32.totalorder %s129, %s130
    %p141 = scmp.eq.s32.totalorder %s18, 0
    %p142 = por %p140, %p141
    %p143 = scmp.ne.s32.totalorder %s129, %s130
    %p144 = scmp.eq.s32.totalorder %s19, 3
    %p145 = por %p143, %p144
    %p147 = scmp.ne.s32.totalorder %s130, %s146
    %p148 = scmp.eq.s32.totalorder %s19, 0
    %p149 = por %p147, %p148
    %s150 = ssub.s32 %s20, %s32
    %s151 = ssub.s32 %s21, %s28
    %s152 = sor.u32 %s150, %s151
    %p153 = scmp.eq.s32.totalorder %s152, 0
    %s155 = sadd.s32 %s154, 1
    %s156 = scalar_select %p153, %s154, %s155
    %p159 = pneg %p153
    %p160 = scmp.eq.s32.totalorder %s13, 3
    %p161 = por %p159, %p160
    %p162 = scmp.ne.s32.totalorder %s154, %s157
    %p163 = scmp.eq.s32.totalorder %s13, 0
    %p164 = por %p162, %p163
    %p165 = scmp.ne.s32.totalorder %s154, %s157
    %p166 = scmp.eq.s32.totalorder %s18, 3
    %p167 = por %p165, %p166
    %p168 = scmp.ne.s32.totalorder %s157, %s158
    %p169 = scmp.eq.s32.totalorder %s18, 0
    %p170 = por %p168, %p169
    %p171 = scmp.ne.s32.totalorder %s157, %s158
    %p172 = scmp.eq.s32.totalorder %s19, 3
    %p173 = por %p171, %p172
    %p175 = scmp.ne.s32.totalorder %s158, %s174
    %p176 = scmp.eq.s32.totalorder %s19, 0
    %p177 = por %p175, %p176
    %s178 = ssub.s32 %s20, %s32
    %s179 = ssub.s32 %s21, %s28
    %s180 = sor.u32 %s178, %s179
    %p181 = scmp.eq.s32.totalorder %s180, 0
    %s183 = sadd.s32 %s182, 1
    %s184 = scalar_select %p181, %s182, %s183
    %p187 = pneg %p181
    %p188 = scmp.eq.s32.totalorder %s13, 3
    %p189 = por %p187, %p188
    %p190 = scmp.ne.s32.totalorder %s182, %s185
    %p191 = scmp.eq.s32.totalorder %s13, 0
    %p192 = por %p190, %p191
    %p193 = scmp.ne.s32.totalorder %s182, %s185
    %p194 = scmp.eq.s32.totalorder %s18, 3
    %p195 = por %p193, %p194
    %p196 = scmp.ne.s32.totalorder %s185, %s186
    %p197 = scmp.eq.s32.totalorder %s18, 0
    %p198 = por %p196, %p197
    %p199 = scmp.ne.s32.totalorder %s185, %s186
    %p200 = scmp.eq.s32.totalorder %s19, 3
    %p201 = por %p199, %p200
    %p203 = scmp.ne.s32.totalorder %s186, %s202
    %p204 = scmp.eq.s32.totalorder %s19, 0
    %p205 = por %p203, %p204
    %p206 = scmp.le.s32.totalorder 1, %s13
    %p207 = scmp.lt.s32.totalorder %s13, 5
    %p208 = pnand %p206, %p207
    %p209 = pneg %p208
    // Predicated region
    $region9: #{basic_block_forward.2} parent=5 // pred_check
      _
    $region10: #{basic_block_forward.2} parent=5 // pred_check_branch
      %211 = sbr.rel (%p208) target = $region12
    $region11: #{basic_block_forward.2} parent=5 // pred_region
      %s212 = ssub.s32 %s13, 1
      // Predicated region
      $region13: #{basic_block_forward.2} parent=11 // pred_check
        %p213 = pneg %p72
      $region14: #{basic_block_forward.2} parent=11 // pred_check_branch
        %215 = sbr.rel (%p213) target = $region16
      $region15: #{basic_block_forward.2} parent=11 // pred_region
        _
      $region16: #{basic_block_forward.2} parent=11 // pred_fallthru
        _
      // Predicated region
      $region17: #{basic_block_forward.2} parent=11 // pred_check
        %p216 = pneg %p93
      $region18: #{basic_block_forward.2} parent=11 // pred_check_branch
        %218 = sbr.rel (%p216) target = $region20
      $region19: #{basic_block_forward.2} parent=11 // pred_region
        _
      $region20: #{basic_block_forward.2} parent=11 // pred_fallthru
        _
      // Predicated region
      $region21: #{basic_block_forward.2} parent=11 // pred_check
        %p219 = pneg %p114
      $region22: #{basic_block_forward.2} parent=11 // pred_check_branch
        %221 = sbr.rel (%p219) target = $region24
      $region23: #{basic_block_forward.2} parent=11 // pred_region
        _
      $region24: #{basic_block_forward.2} parent=11 // pred_fallthru
        _
    $region12: #{basic_block_forward.2} parent=5 // pred_fallthru
      _
    %p222 = scmp.lt.s32.totalorder %s13, 4
    // Predicated region
    $region25: #{basic_block_forward.2} parent=5 // pred_check
      %p223 = pneg %p222
    $region26: #{basic_block_forward.2} parent=5 // pred_check_branch
      %225 = sbr.rel (%p223) target = $region28
    $region27: #{basic_block_forward.2} parent=5 // pred_region
      // Predicated region
      $region29: #{basic_block_forward.2} parent=27 // pred_check
        %p226 = pneg %p45
      $region30: #{basic_block_forward.2} parent=27 // pred_check_branch
        %228 = sbr.rel (%p226) target = $region32
      $region31: #{basic_block_forward.2} parent=27 // pred_region
        %p229 = scmp.lt.s32.totalorder %s20, 1
        %s230 = scalar_select %p229, %s20, 1
        %s231 = smul.addr %s230, 2
        %s232 = smul.addr %s231, 4
        %s233 = scalar_lea.vmem %s0, %s232
      $region32: #{basic_block_forward.2} parent=27 // pred_fallthru
        _
    $region28: #{basic_block_forward.2} parent=5 // pred_fallthru
      _
    %p234 = scmp.le.s32.totalorder 1, %s13
    %p235 = scmp.lt.s32.totalorder %s13, 5
    %p236 = pnand %p234, %p235
    %p237 = pneg %p236
    // Predicated region
    $region33: #{basic_block_forward.2} parent=5 // pred_check
      _
    $region34: #{basic_block_forward.2} parent=5 // pred_check_branch
      %239 = sbr.rel (%p236) target = $region36
    $region35: #{basic_block_forward.2} parent=5 // pred_region
      %s240 = ssub.s32 %s13, 1
      %p241 = scmp.lt.s32.totalorder %s22, 1
      %s242 = scalar_select %p241, %s22, 1
      %s243 = smul.addr %s242, 2
      %s244 = smul.addr %s243, 4
      %s245 = scalar_lea.vmem %s0, %s244
      %p246 = pneg %p51
      %p247 = pneg %p48
      %p248 = pneg %p72
      %p249 = pneg %p69
      %p250 = pneg %p93
      %p251 = pneg %p90
      %p252 = pneg %p114
      %p253 = pneg %p111
      %p254 = pneg %p142
      %p255 = pneg %p139
      %p256 = scmp.lt.s32.totalorder %s22, 1
      %s257 = scalar_select %p256, %s22, 1
      %p258 = scmp.lt.s32.totalorder %s23, 1
      %s259 = scalar_select %p258, %s23, 1
      %s260 = smul.addr %s257, 2
      %s261 = sadd.s32 %s259, %s260
      %s262 = smul.addr %s261, 4
      %s263 = scalar_lea.vmem %s4, %s262
      %p264 = pneg %p170
      %p265 = pneg %p167
      %p266 = scmp.lt.s32.totalorder %s22, 1
      %s267 = scalar_select %p266, %s22, 1
      %p268 = scmp.lt.s32.totalorder %s23, 1
      %s269 = scalar_select %p268, %s23, 1
      %s270 = smul.addr %s267, 2
      %s271 = sadd.s32 %s269, %s270
      %s272 = smul.addr %s271, 4
      %s273 = scalar_lea.vmem %s5, %s272
      %p274 = pneg %p198
      %p275 = pneg %p195
      %p276 = scmp.lt.s32.totalorder %s22, 1
      %s277 = scalar_select %p276, %s22, 1
      %p278 = scmp.lt.s32.totalorder %s23, 1
      %s279 = scalar_select %p278, %s23, 1
      %s280 = smul.addr %s277, 2
      %s281 = sadd.s32 %s279, %s280
      %s282 = smul.addr %s281, 4
      %s283 = scalar_lea.vmem %s6, %s282
      %p284 = scmp.lt.s32.totalorder %s22, 1
      %s285 = scalar_select %p284, %s22, 1
      %s286 = smul.addr %s285, 2
      %s287 = smul.addr %s286, 4
      %s288 = scalar_lea.vmem %s0, %s287
      %p289 = scmp.lt.s32.totalorder %s22, 1
      %s290 = scalar_select %p289, %s22, 1
      %p291 = scmp.lt.s32.totalorder %s23, 1
      %s292 = scalar_select %p291, %s23, 1
      %s293 = smul.addr %s290, 2
      %s294 = sadd.s32 %s292, %s293
      %s295 = smul.addr %s294, 4
      %s296 = scalar_lea.vmem %s4, %s295
      %p297 = scmp.lt.s32.totalorder %s22, 1
      %s298 = scalar_select %p297, %s22, 1
      %p299 = scmp.lt.s32.totalorder %s23, 1
      %s300 = scalar_select %p299, %s23, 1
      %s301 = smul.addr %s298, 2
      %s302 = sadd.s32 %s300, %s301
      %s303 = smul.addr %s302, 4
      %s304 = scalar_lea.vmem %s5, %s303
      %p305 = scmp.lt.s32.totalorder %s22, 1
      %s306 = scalar_select %p305, %s22, 1
      %p307 = scmp.lt.s32.totalorder %s23, 1
      %s308 = scalar_select %p307, %s23, 1
      %s309 = smul.addr %s306, 2
      %s310 = sadd.s32 %s308, %s309
      %s311 = smul.addr %s310, 4
      %s312 = scalar_lea.vmem %s6, %s311
      %p314 = scmp.eq.s32.totalorder %s23, 0
      // Predicated region
      $region37: #{basic_block_forward.2} parent=35 // pred_check
        %p315 = pneg %p314
      $region38: #{basic_block_forward.2} parent=35 // pred_check_branch
        %317 = sbr.rel (%p315) target = $region40
      $region39: #{basic_block_forward.2} parent=35 // pred_region
        %v318 = vld [vmem:[%s288] sm:$0xff]
        %v319 = vld [vmem:[%s1] sm:$0xf]
        %321 = vset.pattern.permute.xlu0 0
        %322 = vperm.xlu0 %321, %v319
        %v323 = vpop.permute.xlu0 %322
        %v325 = vunpack.c.l.s4 839922192
        %v326 = vunpack.c.0.s8 %v325
        %v327 = vlaneseq
        %v328 = vshrl.u32 %v327, 7
        %v329 = vsub.s32 %v326, %v328
        %v330 = vrot.slane %v323, %v329
        %v332 = vmul.f32 %v318, %v330
        %v333 = vld [vmem:[%s2] sm:$0xf]
        %335 = vset.pattern.permute.xlu0 0
        %336 = vperm.xlu0 %335, %v333
        %v337 = vpop.permute.xlu0 %336
        %v339 = vunpack.c.l.s4 839922192
        %v340 = vunpack.c.0.s8 %v339
        %v341 = vlaneseq
        %v342 = vshrl.u32 %v341, 7
        %v343 = vsub.s32 %v340, %v342
        %v344 = vrot.slane %v337, %v343
        %v346 = vadd.f32 %v332, %v344
        %v347 = vmax.f32 %v346, 0.0
        %349 = vrot.lane.b32.xlu0 %v347, 17
        %v350 = vpop.permute.xlu0 %349
        %v351 = vrot.slane %v350, 4
        %vm352 = vcmask 138240
        %v353 = vsel %vm352, %v351, %v350
        %vm356 = vcmask 1043592
        %vm357 = vcmask 1047556
        %vm358 = vmor %vm357, %vm356
        %359 = vst.msk [vmem:[#allocation2] sm:$0xff] %vm358, %v353
        %vm360 = vcmask 134144
        %361 = vst.msk [vmem:[#allocation2 + $0x8] sm:$0xf] %vm360, %v351
        %362 = vst.msk [vmem:[#allocation2] sm:$0xf] %vm360, 0.0
        %vm363 = vcmask 273544
        %364 = vst.msk [vmem:[#allocation2 + $0x8] sm:$0xf] %vm363, 0.0
        %v365 = vlaneseq
        %v366 = vand.u32 %v365, 127
        %v367 = vadd.s32 %v366, 128
        %vm368 = vcmp.lt.s32.totalorder %v366, 0
        %v369 = vsub.s32 0, %v366
        %v370 = vsel %vm368, %v369, %v366
        %v371 = vshrl.u32 %v370, 4
        %v372 = vand.u32 %v370, 15
        %v373 = vsub.s32 0, %v372
        %v374 = vsel %vm368, %v373, %v372
        %vm375 = vcmp.lt.s32.totalorder %v367, 0
        %v376 = vsub.s32 0, %v367
        %v377 = vsel %vm375, %v376, %v367
        %v378 = vshrl.u32 %v377, 4
        %v379 = vand.u32 %v377, 15
        %v380 = vsub.s32 0, %v379
        %v381 = vsel %vm375, %v380, %v379
        %vm382 = vcmp.ne.s32.totalorder %v374, 0
        %vm383 = vcmp.ne.s32.totalorder %v381, 0
        %vm384 = vcmp.lt.s32.totalorder %v374, 0
        %vm385 = vcmp.lt.s32.totalorder %v381, 0
        %vm386 = vmand %vm384, %vm382
        %vm387 = vmand %vm385, %vm383
        %v388 = vadd.s32 %v374, 16
        %v389 = vadd.s32 %v381, 16
        %v390 = vsel %vm386, %v388, %v374
        %v391 = vsel %vm387, %v389, %v381
        %vm392 = vcmp.gt.s32.totalorder %v390, 0
        %vm393 = vcmp.gt.s32.totalorder %v391, 0
        %vm394 = vcmp.lt.s32.totalorder %v390, 15
        %vm395 = vcmp.lt.s32.totalorder %v391, 15
        %v396 = vld [vmem:[#allocation2] sm:$0xff]
        %v397 = vsel %vm392, 1, 0
        %v398 = vsel %vm393, 1, 0
        %vm399 = vcmp.eq.s32.totalorder %v397, 1
        %vm400 = vcmp.eq.s32.totalorder %v398, 1
        %v402 = vcombine.high %v396, %v396
        %v404 = vsel %vm399, %v396, 0.0
        %v405 = vsel %vm400, %v402, 0.0
        %v406 = vpack.c.bf16 %v404, %v404
        %v407 = vpack.c.bf16 %v405, %v405
        %408 = vst [vmem:[#allocation3] sm:$0x3] %v406
        %s409 = scalar_lea.vmem [#allocation3], 20
        %410 = vst [vmem:[%s409] sm:$0x3] %v407
        %v411 = vld [vmem:[#allocation2] sm:$0xff]
        %v412 = vld [vmem:[#allocation2 + $0x8] sm:$0xf]
        %v414 = vcombine.high %v411, %v411
        %v416 = vpack.c.bf16 %v411, %v411
        %v417 = vpack.c.bf16 %v414, %v414
        %v418 = vpack.c.bf16 %v412, %v412
        %v421 = vunpack.c.l.b16 %v416
        %v422 = vunpack.c.l.b16 %v417
        %v423 = vpack.c.b16 %v422, %v421
        %v424 = vrot.slane %v423, 6
        %425 = vrot.lane.b32.xlu0 %v424, 127
        %v426 = vpop.permute.xlu0 %425
        %v427 = vrot.slane %v426, 4
        %vm428 = vcmask 1039360
        %v429 = vsel %vm428, %v426, %v427
        %431 = vst [vmem:[#allocation3] sm:$0xc] %v429
        %v433 = vunpack.c.l.b16 %v418
        %v434 = vpack.c.b16 %v433, %v422
        %v435 = vrot.slane %v434, 6
        %436 = vrot.lane.b32.xlu0 %v435, 127
        %v437 = vpop.permute.xlu0 %436
        %v438 = vrot.slane %v437, 4
        %v439 = vsel %vm428, %v437, %v438
        %441 = vst [vmem:[%s409] sm:$0xc] %v439
        %v442 = vld [vmem:[#allocation2] sm:$0xff]
        %v443 = vld [vmem:[#allocation2 + $0x8] sm:$0xf]
        %v444 = vsel %vm394, 1, 0
        %v445 = vsel %vm395, 1, 0
        %vm446 = vcmp.eq.s32.totalorder %v444, 1
        %vm447 = vcmp.eq.s32.totalorder %v445, 1
        %v450 = vcombine.high %v442, %v442
        %451 = vrot.lane.b32.xlu0 %v442, 126
        %v452 = vpop.permute.xlu0 %451
        %453 = vrot.lane.b32.xlu0 %v450, 126
        %v454 = vpop.permute.xlu0 %453
        %455 = vrot.lane.b32.xlu0 %v443, 126
        %v456 = vpop.permute.xlu0 %455
        %vm457 = vcmask 1031168
        %v458 = vsel %vm457, %v452, %v454
        %v459 = vsel %vm457, %v454, %v456
        %v462 = vsel %vm446, %v458, 0.0
        %v463 = vsel %vm447, %v459, 0.0
        %v464 = vpack.c.bf16 %v462, %v462
        %v465 = vpack.c.bf16 %v463, %v463
        %466 = vst [vmem:[#allocation3 + $0x4] sm:$0x3] %v464
        %467 = vst [vmem:[%s409 + $0x4] sm:$0x3] %v465
        %v468 = vld [vmem:[#allocation2] sm:$0xff]
        %v469 = vld [vmem:[#allocation2 + $0x8] sm:$0xf]
        %v472 = vcombine.high %v468, %v468
        %473 = vrot.lane.b32.xlu0 %v468, 112
        %v474 = vpop.permute.xlu0 %473
        %475 = vrot.lane.b32.xlu0 %v472, 112
        %v476 = vpop.permute.xlu0 %475
        %477 = vrot.lane.b32.xlu0 %v469, 112
        %v478 = vpop.permute.xlu0 %477
        %vm479 = vcmask 916480
        %v480 = vsel %vm479, %v474, %v476
        %v481 = vsel %vm479, %v476, %v478
        %v484 = vsel %vm399, %v480, 0.0
        %v485 = vsel %vm400, %v481, 0.0
        %v486 = vpack.c.bf16 %v484, %v484
        %v487 = vpack.c.bf16 %v485, %v485
        %v489 = vunpack.c.l.b16 %v486
        %v490 = vpack.c.b16 %v489, %v489
        %v491 = vrot.slane %v490, 6
        %493 = vst [vmem:[#allocation3 + $0x4] sm:$0xc] %v491
        %v495 = vunpack.c.l.b16 %v487
        %v496 = vpack.c.b16 %v495, %v495
        %v497 = vrot.slane %v496, 6
        %499 = vst [vmem:[%s409 + $0x4] sm:$0xc] %v497
        %v500 = vld [vmem:[#allocation2] sm:$0xff]
        %v501 = vld [vmem:[#allocation2 + $0x8] sm:$0xf]
        %v503 = vcombine.high %v500, %v500
        %v505 = vpack.c.bf16 %v500, %v500
        %v506 = vpack.c.bf16 %v503, %v503
        %v507 = vpack.c.bf16 %v501, %v501
        %v510 = vunpack.c.l.b16 %v505
        %v511 = vunpack.c.l.b16 %v506
        %v512 = vpack.c.b16 %v511, %v510
        %513 = vrot.lane.b32.xlu0 %v512, 111
        %v514 = vpop.permute.xlu0 %513
        %v515 = vrot.slane %v514, 4
        %vm516 = vcmask 908288
        %v517 = vsel %vm516, %v514, %v515
        %519 = vst [vmem:[#allocation3 + $0x8] sm:$0x3] %v517
        %v521 = vunpack.c.l.b16 %v507
        %v522 = vpack.c.b16 %v521, %v511
        %523 = vrot.lane.b32.xlu0 %v522, 111
        %v524 = vpop.permute.xlu0 %523
        %v525 = vrot.slane %v524, 4
        %v526 = vsel %vm516, %v524, %v525
        %528 = vst [vmem:[%s409 + $0x8] sm:$0x3] %v526
        %v529 = vld [vmem:[#allocation2] sm:$0xff]
        %v530 = vld [vmem:[#allocation2 + $0x8] sm:$0xf]
        %v533 = vcombine.high %v529, %v529
        %534 = vrot.lane.b32.xlu0 %v529, 110
        %v535 = vpop.permute.xlu0 %534
        %536 = vrot.lane.b32.xlu0 %v533, 110
        %v537 = vpop.permute.xlu0 %536
        %538 = vrot.lane.b32.xlu0 %v530, 110
        %v539 = vpop.permute.xlu0 %538
        %vm540 = vcmask 900096
        %v541 = vsel %vm540, %v535, %v537
        %v542 = vsel %vm540, %v537, %v539
        %v545 = vsel %vm446, %v541, 0.0
        %v546 = vsel %vm447, %v542, 0.0
        %v547 = vpack.c.bf16 %v545, %v545
        %v548 = vpack.c.bf16 %v546, %v546
        %v550 = vunpack.c.l.b16 %v547
        %v551 = vpack.c.b16 %v550, %v550
        %v552 = vrot.slane %v551, 6
        %554 = vst [vmem:[#allocation3 + $0x8] sm:$0xc] %v552
        %v556 = vunpack.c.l.b16 %v548
        %v557 = vpack.c.b16 %v556, %v556
        %v558 = vrot.slane %v557, 6
        %560 = vst [vmem:[%s409 + $0x8] sm:$0xc] %v558
        %v561 = vld [vmem:[#allocation2] sm:$0xff]
        %v562 = vld [vmem:[#allocation2 + $0x8] sm:$0xf]
        %v565 = vcombine.high %v561, %v561
        %566 = vrot.lane.b32.xlu0 %v561, 96
        %v567 = vpop.permute.xlu0 %566
        %568 = vrot.lane.b32.xlu0 %v565, 96
        %v569 = vpop.permute.xlu0 %568
        %570 = vrot.lane.b32.xlu0 %v562, 96
        %v571 = vpop.permute.xlu0 %570
        %vm572 = vcmask 785408
        %v573 = vsel %vm572, %v567, %v569
        %v574 = vsel %vm572, %v569, %v571
        %v577 = vsel %vm399, %v573, 0.0
        %v578 = vsel %vm400, %v574, 0.0
        %v579 = vpack.c.bf16 %v577, %v577
        %v580 = vpack.c.bf16 %v578, %v578
        %581 = vst [vmem:[#allocation3 + $0xc] sm:$0x3] %v579
        %582 = vst [vmem:[%s409 + $0xc] sm:$0x3] %v580
        %v583 = vld [vmem:[#allocation2] sm:$0xff]
        %v584 = vld [vmem:[#allocation2 + $0x8] sm:$0xf]
        %v586 = vcombine.high %v583, %v583
        %v588 = vpack.c.bf16 %v583, %v583
        %v589 = vpack.c.bf16 %v586, %v586
        %v590 = vpack.c.bf16 %v584, %v584
        %v593 = vunpack.c.l.b16 %v588
        %v594 = vunpack.c.l.b16 %v589
        %v595 = vpack.c.b16 %v594, %v593
        %v596 = vrot.slane %v595, 6
        %597 = vrot.lane.b32.xlu0 %v596, 95
        %v598 = vpop.permute.xlu0 %597
        %v599 = vrot.slane %v598, 4
        %vm600 = vcmask 777216
        %v601 = vsel %vm600, %v598, %v599
        %603 = vst [vmem:[#allocation3 + $0xc] sm:$0xc] %v601
        %v605 = vunpack.c.l.b16 %v590
        %v606 = vpack.c.b16 %v605, %v594
        %v607 = vrot.slane %v606, 6
        %608 = vrot.lane.b32.xlu0 %v607, 95
        %v609 = vpop.permute.xlu0 %608
        %v610 = vrot.slane %v609, 4
        %v611 = vsel %vm600, %v609, %v610
        %613 = vst [vmem:[%s409 + $0xc] sm:$0xc] %v611
        %v614 = vld [vmem:[#allocation2] sm:$0xff]
        %v615 = vld [vmem:[#allocation2 + $0x8] sm:$0xf]
        %v618 = vcombine.high %v614, %v614
        %619 = vrot.lane.b32.xlu0 %v614, 94
        %v620 = vpop.permute.xlu0 %619
        %621 = vrot.lane.b32.xlu0 %v618, 94
        %v622 = vpop.permute.xlu0 %621
        %623 = vrot.lane.b32.xlu0 %v615, 94
        %v624 = vpop.permute.xlu0 %623
        %vm625 = vcmask 769024
        %v626 = vsel %vm625, %v620, %v622
        %v627 = vsel %vm625, %v622, %v624
        %v630 = vsel %vm446, %v626, 0.0
        %v631 = vsel %vm447, %v627, 0.0
        %v632 = vpack.c.bf16 %v630, %v630
        %v633 = vpack.c.bf16 %v631, %v631
        %634 = vst [vmem:[#allocation3 + $0x10] sm:$0x3] %v632
        %635 = vst [vmem:[%s409 + $0x10] sm:$0x3] %v633
      $region40: #{basic_block_forward.2} parent=35 // pred_fallthru
        _
      %v636 = vld [vmem:[%s3] sm:$0x3]
      %s637 = smul.u32 %s23, 5
      %s638 = smul.addr %s637, 4
      %s639 = scalar_lea.vmem [#allocation3], %s638
      %v640 = vld [vmem:[%s639] sm:$0xf]
      %v641 = vld [vmem:[%s639 + $0x4] sm:$0xf]
      %v642 = vld [vmem:[%s639 + $0x8] sm:$0xf]
      %v643 = vld [vmem:[%s639 + $0xc] sm:$0xf]
      %v644 = vld [vmem:[%s639 + $0x10] sm:$0x3]
      %v650 = vunpack.c.l.b16 %v640
      %v651 = vunpack.c.l.b16 %v641
      %v652 = vunpack.c.l.b16 %v642
      %v653 = vunpack.c.l.b16 %v643
      %v654 = vunpack.c.l.b16 %v644
      %v655 = vpack.c.b16 %v651, %v650
      %v656 = vpack.c.b16 %v653, %v652
      %v657 = vpack.c.b16 %v654, %v654
      %vm660 = vcmask 293888
      %v662 = vsel %vm660, %v636, 0
      %vm664 = vcmask 1041408
      %v666 = vsel %vm664, %v657, 0
      %668 = vmatprep.subr.bf16.mxu0 0
      %669 = vmatpush1.bf16.msra.mxu0 %v655
      %670 = vmatprep.subr.bf16.mxu0 0
      %671 = vmatpush1.bf16.msra.mxu0 %v656
      %672 = vmatprep.subr.bf16.mxu0 0
      %673 = vmatpush1.bf16.msra.mxu0 %v666
      %674 = vmatprep.subr.bf16.mxu0 0
      %675 = vmatpush1.bf16.msra.mxu0 0
      %676 = vmatprep.subr.bf16.mxu0 0
      %677 = vmatpush1.bf16.msra.mxu0 0
      %678 = vmatprep.subr.bf16.mxu0 0
      %679 = vmatpush1.bf16.msra.mxu0 0
      %680 = vmatprep.subr.bf16.mxu0 0
      %681 = vmatpush1.bf16.msra.mxu0 0
      %682 = vmatprep.subr.bf16.mxu0 0
      %683 = vmatpush1.bf16.msra.mxu0 0
      %684 = vmatprep.subr.bf16.mxu0 0
      %685 = vmatpush1.bf16.msra.mxu0 0
      %686 = vmatprep.subr.bf16.mxu0 0
      %687 = vmatpush1.bf16.msra.mxu0 0
      %688 = vmatprep.subr.bf16.mxu0 0
      %689 = vmatpush1.bf16.msra.mxu0 0
      %690 = vmatprep.subr.bf16.mxu0 0
      %691 = vmatpush1.bf16.msra.mxu0 0
      %692 = vmatprep.subr.bf16.mxu0 0
      %693 = vmatpush1.bf16.msra.mxu0 0
      %694 = vmatprep.subr.bf16.mxu0 0
      %695 = vmatpush1.bf16.msra.mxu0 0
      %696 = vmatprep.subr.bf16.mxu0 0
      %697 = vmatpush1.bf16.msra.mxu0 0
      %698 = vmatprep.subr.bf16.mxu0 0
      %699 = vmatpush1.bf16.msra.mxu0 0
      %700 = vmatprep.mubr.bf16.mxu0 0
      %701 = vmatmul.mubr.bf16.gmra.mrb[0].mxu0 %v662
      %v702 = vpop.f32.mrb[0].mxu0
      %v703 = vadd.f32 0.0, %v702
      %v704 = vpop.f32.mrb[0].mxu0
      %v705 = vpop.f32.mrb[0].mxu0
      %v706 = vpop.f32.mrb[0].mxu0
      %707 = vdwg.mxu0
      %708 = vst [vmem:[%s296] sm:$0xf] %v703
      %vm709 = vcmask 1043456
      %v710 = vsel %vm709, %v703, 0.0
      %711 = vadd.xlane.f32.xlu0 %v710
      %v712 = vpop.xlane.xlu0 %711
      %vm713 = vcmask 3072
      %714 = vst.msk [vmem:[%s304] sm:$0xf] %vm713, %v712
      %v715 = vmul.f32 %v703, %v703
      %v716 = vsel %vm709, %v715, 0.0
      %717 = vadd.xlane.f32.xlu0 %v716
      %v718 = vpop.xlane.xlu0 %717
      %719 = vst.msk [vmem:[%s312] sm:$0xf] %vm713, %v718
      %p720 = scmp.lt.s32.totalorder %s22, 1
      %s721 = scalar_select %p720, %s22, 1
      %p722 = scmp.lt.s32.totalorder %s23, 1
      %s723 = scalar_select %p722, %s23, 1
      %s724 = smul.addr %s721, 2
      %s725 = sadd.s32 %s723, %s724
      %s726 = smul.addr %s725, 4
      %s727 = scalar_lea.vmem %s4, %s726
      %p728 = scmp.lt.s32.totalorder %s22, 1
      %s729 = scalar_select %p728, %s22, 1
      %p730 = scmp.lt.s32.totalorder %s23, 1
      %s731 = scalar_select %p730, %s23, 1
      %s732 = smul.addr %s729, 2
      %s733 = sadd.s32 %s731, %s732
      %s734 = smul.addr %s733, 4
      %s735 = scalar_lea.vmem %s5, %s734
      %p736 = scmp.lt.s32.totalorder %s22, 1
      %s737 = scalar_select %p736, %s22, 1
      %p738 = scmp.lt.s32.totalorder %s23, 1
      %s739 = scalar_select %p738, %s23, 1
      %s740 = smul.addr %s737, 2
      %s741 = sadd.s32 %s739, %s740
      %s742 = smul.addr %s741, 4
      %s743 = scalar_lea.vmem %s6, %s742
      // Predicated region
      $region41: #{basic_block_forward.2} parent=35 // pred_check
        %p744 = pneg %p139
      $region42: #{basic_block_forward.2} parent=35 // pred_check_branch
        %746 = sbr.rel (%p744) target = $region44
      $region43: #{basic_block_forward.2} parent=35 // pred_region
        _
      $region44: #{basic_block_forward.2} parent=35 // pred_fallthru
        _
      // Predicated region
      $region45: #{basic_block_forward.2} parent=35 // pred_check
        %p747 = pneg %p167
      $region46: #{basic_block_forward.2} parent=35 // pred_check_branch
        %749 = sbr.rel (%p747) target = $region48
      $region47: #{basic_block_forward.2} parent=35 // pred_region
        _
      $region48: #{basic_block_forward.2} parent=35 // pred_fallthru
        _
      // Predicated region
      $region49: #{basic_block_forward.2} parent=35 // pred_check
        %p750 = pneg %p195
      $region50: #{basic_block_forward.2} parent=35 // pred_check_branch
        %752 = sbr.rel (%p750) target = $region52
      $region51: #{basic_block_forward.2} parent=35 // pred_region
        _
      $region52: #{basic_block_forward.2} parent=35 // pred_fallthru
        _
    $region36: #{basic_block_forward.2} parent=5 // pred_fallthru
      _
    %p753 = scmp.le.s32.totalorder 2, %s13
    // Predicated region
    $region53: #{basic_block_forward.2} parent=5 // pred_check
      %p754 = pneg %p753
    $region54: #{basic_block_forward.2} parent=5 // pred_check_branch
      %756 = sbr.rel (%p754) target = $region56
    $region55: #{basic_block_forward.2} parent=5 // pred_region
      %s757 = ssub.s32 %s13, 2
      // Predicated region
      $region57: #{basic_block_forward.2} parent=55 // pred_check
        %p758 = pneg %p145
      $region58: #{basic_block_forward.2} parent=55 // pred_check_branch
        %760 = sbr.rel (%p758) target = $region60
      $region59: #{basic_block_forward.2} parent=55 // pred_region
        %p761 = scmp.lt.s32.totalorder %s24, 1
        %s762 = scalar_select %p761, %s24, 1
        %p763 = scmp.lt.s32.totalorder %s25, 1
        %s764 = scalar_select %p763, %s25, 1
        %s765 = smul.addr %s762, 2
        %s766 = sadd.s32 %s764, %s765
        %s767 = smul.addr %s766, 4
        %s768 = scalar_lea.vmem %s4, %s767
      $region60: #{basic_block_forward.2} parent=55 // pred_fallthru
        _
      // Predicated region
      $region61: #{basic_block_forward.2} parent=55 // pred_check
        %p769 = pneg %p173
      $region62: #{basic_block_forward.2} parent=55 // pred_check_branch
        %771 = sbr.rel (%p769) target = $region64
      $region63: #{basic_block_forward.2} parent=55 // pred_region
        %p772 = scmp.lt.s32.totalorder %s24, 1
        %s773 = scalar_select %p772, %s24, 1
        %p774 = scmp.lt.s32.totalorder %s25, 1
        %s775 = scalar_select %p774, %s25, 1
        %s776 = smul.addr %s773, 2
        %s777 = sadd.s32 %s775, %s776
        %s778 = smul.addr %s777, 4
        %s779 = scalar_lea.vmem %s5, %s778
      $region64: #{basic_block_forward.2} parent=55 // pred_fallthru
        _
      // Predicated region
      $region65: #{basic_block_forward.2} parent=55 // pred_check
        %p780 = pneg %p201
      $region66: #{basic_block_forward.2} parent=55 // pred_check_branch
        %782 = sbr.rel (%p780) target = $region68
      $region67: #{basic_block_forward.2} parent=55 // pred_region
        %p783 = scmp.lt.s32.totalorder %s24, 1
        %s784 = scalar_select %p783, %s24, 1
        %p785 = scmp.lt.s32.totalorder %s25, 1
        %s786 = scalar_select %p785, %s25, 1
        %s787 = smul.addr %s784, 2
        %s788 = sadd.s32 %s786, %s787
        %s789 = smul.addr %s788, 4
        %s790 = scalar_lea.vmem %s6, %s789
      $region68: #{basic_block_forward.2} parent=55 // pred_fallthru
        _
    $region56: #{basic_block_forward.2} parent=5 // pred_fallthru
      _
  $region6: #{basic_block_forward.2} parent=0 // loop_footer
    %s17 = sadd.s32 1, %s13
  $region7: #{basic_block_forward.2} parent=0 // loop_footer_branch
    %12 = sbr.rel target = $region3
  $region8: #{basic_block_forward.2} parent=0 // loop_exit
    _

// kernel: basic_block_forward.3
$region0: #{basic_block_forward.3}
  #allocation0 [shape = 'u32[]', space=smem, size = 0x4, offset = 0x4, fixed_abs, tag = 'smem constant byte address 0x4 - core index']
  #allocation1 [shape = 'u32[144,128]{1,0:T(1,128)}', space=vmem, size = 0x12000, scoped, tag = 'internal scratch']
  #allocation2 [shape = 'f32[4,290]{1,0:T(4,128)}', space=vmem, size = 0x1800, scoped, tag = 'scratch operand']
  #allocation3 [shape = 'bf16[2,36,128]{2,1,0:T(8,128)(2,1)}', space=vmem, size = 0x5000, scoped, tag = 'scratch operand']
  %s0 = inlined_call_operand.vmem [shape: f32[2,4,256], index: 0, kind: input, shape index: {}]
  %s1 = inlined_call_operand.vmem [shape: f32[4,1], index: 1, kind: input, shape index: {}]
  %s2 = inlined_call_operand.vmem [shape: f32[4,1], index: 2, kind: input, shape index: {}]
  %s3 = inlined_call_operand.vmem [shape: bf16[4,36], index: 3, kind: input, shape index: {}]
  %s4 = inlined_call_operand.vmem [shape: f32[2,4,256], index: 4, kind: output, shape index: {}]
  %s5 = sld [smem:[#allocation0]]
  $region53: #{basic_block_forward.3} parent=0
    _
  %s7 = ssub.s32 1, %s5
  %s8 = scalar_select 0, %s7, %s5
  loop: start=0, step=1, limit=6
  $region2: #{basic_block_forward.3} parent=0 // loop_pre_header
    _
  $region3: #{basic_block_forward.3} parent=0 // loop_header
    %s10 = sphi 0, %s14
    %p11 = scmp.ge.s32.totalorder %s10, 6
    %s17 = sphi 0, %s29
    %s18 = sphi 0, %s25
    %s19 = sphi 0, %s17
    %s20 = sphi 0, %s18
    %s21 = sphi 0, %s19
    %s22 = sphi 0, %s20
    %s32 = sphi 0, %s34
    %s35 = sphi 0, %s32
    %s36 = sphi 0, %s35
    %s52 = sphi 0, %s36
    %s56 = sphi 0, %s56
    %s58 = sphi 0, %s56
    %s59 = sphi 0, %s58
    %s73 = sphi 0, %s59
    %s77 = sphi 0, %s77
    %s79 = sphi 0, %s77
    %s80 = sphi 0, %s79
    %s94 = sphi 0, %s80
    %s98 = sphi 0, %s98
    %s100 = sphi 0, %s98
    %s101 = sphi 0, %s100
    %s115 = sphi 0, %s101
    %s123 = sphi 0, %s125
    %s126 = sphi 0, %s123
    %s127 = sphi 0, %s126
    %s143 = sphi 0, %s127
  $region4: #{basic_block_forward.3} parent=0 // loop_header_branch
    %13 = sbr.rel (%p11) target = $region8
  $region5: #{basic_block_forward.3} parent=0 // loop_body
    %s15 = ssub.s32 %s10, 1
    %s16 = ssub.s32 %s10, 2
    %s23 = sadd.s32 1, %s18
    %p24 = scmp.ge.s32.totalorder %s23, 2
    %s25 = scalar_select %p24, 0, %s23
    %s26 = sadd.s32 1, %s17
    %s27 = scalar_select %p24, %s26, %s17
    %p28 = scmp.ge.s32.totalorder %s27, 2
    %s29 = scalar_select %p28, 0, %s27
    %s30 = ssub.s32 %s17, %s29
    %p31 = scmp.eq.s32.totalorder %s30, 0
    %s33 = sadd.s32 %s32, 1
    %s34 = scalar_select %p31, %s32, %s33
    %p37 = pneg %p31
    %p38 = scmp.eq.s32.totalorder %s10, 3
    %p39 = por %p37, %p38
    %p40 = scmp.ne.s32.totalorder %s32, %s35
    %p41 = scmp.eq.s32.totalorder %s10, 0
    %p42 = por %p40, %p41
    %p43 = scmp.ne.s32.totalorder %s32, %s35
    %p44 = scmp.eq.s32.totalorder %s15, 3
    %p45 = por %p43, %p44
    %p46 = scmp.ne.s32.totalorder %s35, %s36
    %p47 = scmp.eq.s32.totalorder %s15, 0
    %p48 = por %p46, %p47
    %p49 = scmp.ne.s32.totalorder %s35, %s36
    %p50 = scmp.eq.s32.totalorder %s16, 3
    %p51 = por %p49, %p50
    %p53 = scmp.ne.s32.totalorder %s36, %s52
    %p54 = scmp.eq.s32.totalorder %s16, 0
    %p55 = por %p53, %p54
    %s57 = sadd.s32 %s56, 1
    %p60 = scmp.eq.s32.totalorder %s10, 3
    %p61 = scmp.ne.s32.totalorder %s56, %s58
    %p62 = scmp.eq.s32.totalorder %s10, 0
    %p63 = por %p61, %p62
    %p64 = scmp.ne.s32.totalorder %s56, %s58
    %p65 = scmp.eq.s32.totalorder %s15, 3
    %p66 = por %p64, %p65
    %p67 = scmp.ne.s32.totalorder %s58, %s59
    %p68 = scmp.eq.s32.totalorder %s15, 0
    %p69 = por %p67, %p68
    %p70 = scmp.ne.s32.totalorder %s58, %s59
    %p71 = scmp.eq.s32.totalorder %s16, 3
    %p72 = por %p70, %p71
    %p74 = scmp.ne.s32.totalorder %s59, %s73
    %p75 = scmp.eq.s32.totalorder %s16, 0
    %p76 = por %p74, %p75
    %s78 = sadd.s32 %s77, 1
    %p81 = scmp.eq.s32.totalorder %s10, 3
    %p82 = scmp.ne.s32.totalorder %s77, %s79
    %p83 = scmp.eq.s32.totalorder %s10, 0
    %p84 = por %p82, %p83
    %p85 = scmp.ne.s32.totalorder %s77, %s79
    %p86 = scmp.eq.s32.totalorder %s15, 3
    %p87 = por %p85, %p86
    %p88 = scmp.ne.s32.totalorder %s79, %s80
    %p89 = scmp.eq.s32.totalorder %s15, 0
    %p90 = por %p88, %p89
    %p91 = scmp.ne.s32.totalorder %s79, %s80
    %p92 = scmp.eq.s32.totalorder %s16, 3
    %p93 = por %p91, %p92
    %p95 = scmp.ne.s32.totalorder %s80, %s94
    %p96 = scmp.eq.s32.totalorder %s16, 0
    %p97 = por %p95, %p96
    %s99 = sadd.s32 %s98, 1
    %p102 = scmp.eq.s32.totalorder %s10, 3
    %p103 = scmp.ne.s32.totalorder %s98, %s100
    %p104 = scmp.eq.s32.totalorder %s10, 0
    %p105 = por %p103, %p104
    %p106 = scmp.ne.s32.totalorder %s98, %s100
    %p107 = scmp.eq.s32.totalorder %s15, 3
    %p108 = por %p106, %p107
    %p109 = scmp.ne.s32.totalorder %s100, %s101
    %p110 = scmp.eq.s32.totalorder %s15, 0
    %p111 = por %p109, %p110
    %p112 = scmp.ne.s32.totalorder %s100, %s101
    %p113 = scmp.eq.s32.totalorder %s16, 3
    %p114 = por %p112, %p113
    %p116 = scmp.ne.s32.totalorder %s101, %s115
    %p117 = scmp.eq.s32.totalorder %s16, 0
    %p118 = por %p116, %p117
    %s119 = ssub.s32 %s17, %s29
    %s120 = ssub.s32 %s18, %s25
    %s121 = sor.u32 %s119, %s120
    %p122 = scmp.eq.s32.totalorder %s121, 0
    %s124 = sadd.s32 %s123, 1
    %s125 = scalar_select %p122, %s123, %s124
    %p128 = pneg %p122
    %p129 = scmp.eq.s32.totalorder %s10, 3
    %p130 = por %p128, %p129
    %p131 = scmp.ne.s32.totalorder %s123, %s126
    %p132 = scmp.eq.s32.totalorder %s10, 0
    %p133 = por %p131, %p132
    %p134 = scmp.ne.s32.totalorder %s123, %s126
    %p135 = scmp.eq.s32.totalorder %s15, 3
    %p136 = por %p134, %p135
    %p137 = scmp.ne.s32.totalorder %s126, %s127
    %p138 = scmp.eq.s32.totalorder %s15, 0
    %p139 = por %p137, %p138
    %p140 = scmp.ne.s32.totalorder %s126, %s127
    %p141 = scmp.eq.s32.totalorder %s16, 3
    %p142 = por %p140, %p141
    %p144 = scmp.ne.s32.totalorder %s127, %s143
    %p145 = scmp.eq.s32.totalorder %s16, 0
    %p146 = por %p144, %p145
    %p147 = scmp.le.s32.totalorder 1, %s10
    %p148 = scmp.lt.s32.totalorder %s10, 5
    %p149 = pnand %p147, %p148
    %p150 = pneg %p149
    // Predicated region
    $region9: #{basic_block_forward.3} parent=5 // pred_check
      _
    $region10: #{basic_block_forward.3} parent=5 // pred_check_branch
      %152 = sbr.rel (%p149) target = $region12
    $region11: #{basic_block_forward.3} parent=5 // pred_region
      %s153 = ssub.s32 %s10, 1
      // Predicated region
      $region13: #{basic_block_forward.3} parent=11 // pred_check
        %p154 = pneg %p69
      $region14: #{basic_block_forward.3} parent=11 // pred_check_branch
        %156 = sbr.rel (%p154) target = $region16
      $region15: #{basic_block_forward.3} parent=11 // pred_region
        _
      $region16: #{basic_block_forward.3} parent=11 // pred_fallthru
        _
      // Predicated region
      $region17: #{basic_block_forward.3} parent=11 // pred_check
        %p157 = pneg %p90
      $region18: #{basic_block_forward.3} parent=11 // pred_check_branch
        %159 = sbr.rel (%p157) target = $region20
      $region19: #{basic_block_forward.3} parent=11 // pred_region
        _
      $region20: #{basic_block_forward.3} parent=11 // pred_fallthru
        _
      // Predicated region
      $region21: #{basic_block_forward.3} parent=11 // pred_check
        %p160 = pneg %p111
      $region22: #{basic_block_forward.3} parent=11 // pred_check_branch
        %162 = sbr.rel (%p160) target = $region24
      $region23: #{basic_block_forward.3} parent=11 // pred_region
        _
      $region24: #{basic_block_forward.3} parent=11 // pred_fallthru
        _
    $region12: #{basic_block_forward.3} parent=5 // pred_fallthru
      _
    %p163 = scmp.lt.s32.totalorder %s10, 4
    // Predicated region
    $region25: #{basic_block_forward.3} parent=5 // pred_check
      %p164 = pneg %p163
    $region26: #{basic_block_forward.3} parent=5 // pred_check_branch
      %166 = sbr.rel (%p164) target = $region28
    $region27: #{basic_block_forward.3} parent=5 // pred_region
      // Predicated region
      $region29: #{basic_block_forward.3} parent=27 // pred_check
        %p167 = pneg %p42
      $region30: #{basic_block_forward.3} parent=27 // pred_check_branch
        %169 = sbr.rel (%p167) target = $region32
      $region31: #{basic_block_forward.3} parent=27 // pred_region
        %p170 = scmp.lt.s32.totalorder %s17, 1
        %s171 = scalar_select %p170, %s17, 1
        %s172 = smul.addr %s171, 2
        %s173 = smul.addr %s172, 4
        %s174 = scalar_lea.vmem %s0, %s173
      $region32: #{basic_block_forward.3} parent=27 // pred_fallthru
        _
    $region28: #{basic_block_forward.3} parent=5 // pred_fallthru
      _
    %p175 = scmp.le.s32.totalorder 1, %s10
    %p176 = scmp.lt.s32.totalorder %s10, 5
    %p177 = pnand %p175, %p176
    %p178 = pneg %p177
    // Predicated region
    $region33: #{basic_block_forward.3} parent=5 // pred_check
      _
    $region34: #{basic_block_forward.3} parent=5 // pred_check_branch
      %180 = sbr.rel (%p177) target = $region36
    $region35: #{basic_block_forward.3} parent=5 // pred_region
      %s181 = ssub.s32 %s10, 1
      %p182 = scmp.lt.s32.totalorder %s19, 1
      %s183 = scalar_select %p182, %s19, 1
      %s184 = smul.addr %s183, 2
      %s185 = smul.addr %s184, 4
      %s186 = scalar_lea.vmem %s0, %s185
      %p187 = pneg %p48
      %p188 = pneg %p45
      %p189 = pneg %p69
      %p190 = pneg %p66
      %p191 = pneg %p90
      %p192 = pneg %p87
      %p193 = pneg %p111
      %p194 = pneg %p108
      %p195 = pneg %p139
      %p196 = pneg %p136
      %p197 = scmp.lt.s32.totalorder %s19, 1
      %s198 = scalar_select %p197, %s19, 1
      %p199 = scmp.lt.s32.totalorder %s20, 1
      %s200 = scalar_select %p199, %s20, 1
      %s201 = smul.addr %s198, 2
      %s202 = sadd.s32 %s200, %s201
      %s203 = smul.addr %s202, 4
      %s204 = scalar_lea.vmem %s4, %s203
      %p205 = scmp.lt.s32.totalorder %s19, 1
      %s206 = scalar_select %p205, %s19, 1
      %s207 = smul.addr %s206, 2
      %s208 = smul.addr %s207, 4
      %s209 = scalar_lea.vmem %s0, %s208
      %p210 = scmp.lt.s32.totalorder %s19, 1
      %s211 = scalar_select %p210, %s19, 1
      %p212 = scmp.lt.s32.totalorder %s20, 1
      %s213 = scalar_select %p212, %s20, 1
      %s214 = smul.addr %s211, 2
      %s215 = sadd.s32 %s213, %s214
      %s216 = smul.addr %s215, 4
      %s217 = scalar_lea.vmem %s4, %s216
      %p219 = scmp.eq.s32.totalorder %s20, 0
      // Predicated region
      $region37: #{basic_block_forward.3} parent=35 // pred_check
        %p220 = pneg %p219
      $region38: #{basic_block_forward.3} parent=35 // pred_check_branch
        %222 = sbr.rel (%p220) target = $region40
      $region39: #{basic_block_forward.3} parent=35 // pred_region
        %v223 = vld [vmem:[%s209] sm:$0xff]
        %v224 = vld [vmem:[%s1] sm:$0xf]
        %226 = vset.pattern.permute.xlu0 0
        %227 = vperm.xlu0 %226, %v224
        %v228 = vpop.permute.xlu0 %227
        %v230 = vunpack.c.l.s4 839922192
        %v231 = vunpack.c.0.s8 %v230
        %v232 = vlaneseq
        %v233 = vshrl.u32 %v232, 7
        %v234 = vsub.s32 %v231, %v233
        %v235 = vrot.slane %v228, %v234
        %v237 = vmul.f32 %v223, %v235
        %v238 = vld [vmem:[%s2] sm:$0xf]
        %240 = vset.pattern.permute.xlu0 0
        %241 = vperm.xlu0 %240, %v238
        %v242 = vpop.permute.xlu0 %241
        %v244 = vunpack.c.l.s4 839922192
        %v245 = vunpack.c.0.s8 %v244
        %v246 = vlaneseq
        %v247 = vshrl.u32 %v246, 7
        %v248 = vsub.s32 %v245, %v247
        %v249 = vrot.slane %v242, %v248
        %v251 = vadd.f32 %v237, %v249
        %v252 = vmax.f32 %v251, 0.0
        %254 = vrot.lane.b32.xlu0 %v252, 17
        %v255 = vpop.permute.xlu0 %254
        %v256 = vrot.slane %v255, 4
        %vm257 = vcmask 138240
        %v258 = vsel %vm257, %v256, %v255
        %vm261 = vcmask 1043592
        %vm262 = vcmask 1047556
        %vm263 = vmor %vm262, %vm261
        %264 = vst.msk [vmem:[#allocation2] sm:$0xff] %vm263, %v258
        %vm265 = vcmask 134144
        %266 = vst.msk [vmem:[#allocation2 + $0x8] sm:$0xf] %vm265, %v256
        %267 = vst.msk [vmem:[#allocation2] sm:$0xf] %vm265, 0.0
        %vm268 = vcmask 273544
        %269 = vst.msk [vmem:[#allocation2 + $0x8] sm:$0xf] %vm268, 0.0
        %v270 = vlaneseq
        %v271 = vand.u32 %v270, 127
        %v272 = vadd.s32 %v271, 128
        %vm273 = vcmp.lt.s32.totalorder %v271, 0
        %v274 = vsub.s32 0, %v271
        %v275 = vsel %vm273, %v274, %v271
        %v276 = vshrl.u32 %v275, 4
        %v277 = vand.u32 %v275, 15
        %v278 = vsub.s32 0, %v277
        %v279 = vsel %vm273, %v278, %v277
        %vm280 = vcmp.lt.s32.totalorder %v272, 0
        %v281 = vsub.s32 0, %v272
        %v282 = vsel %vm280, %v281, %v272
        %v283 = vshrl.u32 %v282, 4
        %v284 = vand.u32 %v282, 15
        %v285 = vsub.s32 0, %v284
        %v286 = vsel %vm280, %v285, %v284
        %vm287 = vcmp.ne.s32.totalorder %v279, 0
        %vm288 = vcmp.ne.s32.totalorder %v286, 0
        %vm289 = vcmp.lt.s32.totalorder %v279, 0
        %vm290 = vcmp.lt.s32.totalorder %v286, 0
        %vm291 = vmand %vm289, %vm287
        %vm292 = vmand %vm290, %vm288
        %v293 = vadd.s32 %v279, 16
        %v294 = vadd.s32 %v286, 16
        %v295 = vsel %vm291, %v293, %v279
        %v296 = vsel %vm292, %v294, %v286
        %vm297 = vcmp.gt.s32.totalorder %v295, 0
        %vm298 = vcmp.gt.s32.totalorder %v296, 0
        %vm299 = vcmp.lt.s32.totalorder %v295, 15
        %vm300 = vcmp.lt.s32.totalorder %v296, 15
        %v301 = vld [vmem:[#allocation2] sm:$0xff]
        %v302 = vsel %vm297, 1, 0
        %v303 = vsel %vm298, 1, 0
        %vm304 = vcmp.eq.s32.totalorder %v302, 1
        %vm305 = vcmp.eq.s32.totalorder %v303, 1
        %v307 = vcombine.high %v301, %v301
        %v309 = vsel %vm304, %v301, 0.0
        %v310 = vsel %vm305, %v307, 0.0
        %v311 = vpack.c.bf16 %v309, %v309
        %v312 = vpack.c.bf16 %v310, %v310
        %313 = vst [vmem:[#allocation3] sm:$0x3] %v311
        %s314 = scalar_lea.vmem [#allocation3], 20
        %315 = vst [vmem:[%s314] sm:$0x3] %v312
        %v316 = vld [vmem:[#allocation2] sm:$0xff]
        %v317 = vld [vmem:[#allocation2 + $0x8] sm:$0xf]
        %v319 = vcombine.high %v316, %v316
        %v321 = vpack.c.bf16 %v316, %v316
        %v322 = vpack.c.bf16 %v319, %v319
        %v323 = vpack.c.bf16 %v317, %v317
        %v326 = vunpack.c.l.b16 %v321
        %v327 = vunpack.c.l.b16 %v322
        %v328 = vpack.c.b16 %v327, %v326
        %v329 = vrot.slane %v328, 6
        %330 = vrot.lane.b32.xlu0 %v329, 127
        %v331 = vpop.permute.xlu0 %330
        %v332 = vrot.slane %v331, 4
        %vm333 = vcmask 1039360
        %v334 = vsel %vm333, %v331, %v332
        %336 = vst [vmem:[#allocation3] sm:$0xc] %v334
        %v338 = vunpack.c.l.b16 %v323
        %v339 = vpack.c.b16 %v338, %v327
        %v340 = vrot.slane %v339, 6
        %341 = vrot.lane.b32.xlu0 %v340, 127
        %v342 = vpop.permute.xlu0 %341
        %v343 = vrot.slane %v342, 4
        %v344 = vsel %vm333, %v342, %v343
        %346 = vst [vmem:[%s314] sm:$0xc] %v344
        %v347 = vld [vmem:[#allocation2] sm:$0xff]
        %v348 = vld [vmem:[#allocation2 + $0x8] sm:$0xf]
        %v349 = vsel %vm299, 1, 0
        %v350 = vsel %vm300, 1, 0
        %vm351 = vcmp.eq.s32.totalorder %v349, 1
        %vm352 = vcmp.eq.s32.totalorder %v350, 1
        %v355 = vcombine.high %v347, %v347
        %356 = vrot.lane.b32.xlu0 %v347, 126
        %v357 = vpop.permute.xlu0 %356
        %358 = vrot.lane.b32.xlu0 %v355, 126
        %v359 = vpop.permute.xlu0 %358
        %360 = vrot.lane.b32.xlu0 %v348, 126
        %v361 = vpop.permute.xlu0 %360
        %vm362 = vcmask 1031168
        %v363 = vsel %vm362, %v357, %v359
        %v364 = vsel %vm362, %v359, %v361
        %v367 = vsel %vm351, %v363, 0.0
        %v368 = vsel %vm352, %v364, 0.0
        %v369 = vpack.c.bf16 %v367, %v367
        %v370 = vpack.c.bf16 %v368, %v368
        %371 = vst [vmem:[#allocation3 + $0x4] sm:$0x3] %v369
        %372 = vst [vmem:[%s314 + $0x4] sm:$0x3] %v370
        %v373 = vld [vmem:[#allocation2] sm:$0xff]
        %v374 = vld [vmem:[#allocation2 + $0x8] sm:$0xf]
        %v377 = vcombine.high %v373, %v373
        %378 = vrot.lane.b32.xlu0 %v373, 112
        %v379 = vpop.permute.xlu0 %378
        %380 = vrot.lane.b32.xlu0 %v377, 112
        %v381 = vpop.permute.xlu0 %380
        %382 = vrot.lane.b32.xlu0 %v374, 112
        %v383 = vpop.permute.xlu0 %382
        %vm384 = vcmask 916480
        %v385 = vsel %vm384, %v379, %v381
        %v386 = vsel %vm384, %v381, %v383
        %v389 = vsel %vm304, %v385, 0.0
        %v390 = vsel %vm305, %v386, 0.0
        %v391 = vpack.c.bf16 %v389, %v389
        %v392 = vpack.c.bf16 %v390, %v390
        %v394 = vunpack.c.l.b16 %v391
        %v395 = vpack.c.b16 %v394, %v394
        %v396 = vrot.slane %v395, 6
        %398 = vst [vmem:[#allocation3 + $0x4] sm:$0xc] %v396
        %v400 = vunpack.c.l.b16 %v392
        %v401 = vpack.c.b16 %v400, %v400
        %v402 = vrot.slane %v401, 6
        %404 = vst [vmem:[%s314 + $0x4] sm:$0xc] %v402
        %v405 = vld [vmem:[#allocation2] sm:$0xff]
        %v406 = vld [vmem:[#allocation2 + $0x8] sm:$0xf]
        %v408 = vcombine.high %v405, %v405
        %v410 = vpack.c.bf16 %v405, %v405
        %v411 = vpack.c.bf16 %v408, %v408
        %v412 = vpack.c.bf16 %v406, %v406
        %v415 = vunpack.c.l.b16 %v410
        %v416 = vunpack.c.l.b16 %v411
        %v417 = vpack.c.b16 %v416, %v415
        %418 = vrot.lane.b32.xlu0 %v417, 111
        %v419 = vpop.permute.xlu0 %418
        %v420 = vrot.slane %v419, 4
        %vm421 = vcmask 908288
        %v422 = vsel %vm421, %v419, %v420
        %424 = vst [vmem:[#allocation3 + $0x8] sm:$0x3] %v422
        %v426 = vunpack.c.l.b16 %v412
        %v427 = vpack.c.b16 %v426, %v416
        %428 = vrot.lane.b32.xlu0 %v427, 111
        %v429 = vpop.permute.xlu0 %428
        %v430 = vrot.slane %v429, 4
        %v431 = vsel %vm421, %v429, %v430
        %433 = vst [vmem:[%s314 + $0x8] sm:$0x3] %v431
        %v434 = vld [vmem:[#allocation2] sm:$0xff]
        %v435 = vld [vmem:[#allocation2 + $0x8] sm:$0xf]
        %v438 = vcombine.high %v434, %v434
        %439 = vrot.lane.b32.xlu0 %v434, 110
        %v440 = vpop.permute.xlu0 %439
        %441 = vrot.lane.b32.xlu0 %v438, 110
        %v442 = vpop.permute.xlu0 %441
        %443 = vrot.lane.b32.xlu0 %v435, 110
        %v444 = vpop.permute.xlu0 %443
        %vm445 = vcmask 900096
        %v446 = vsel %vm445, %v440, %v442
        %v447 = vsel %vm445, %v442, %v444
        %v450 = vsel %vm351, %v446, 0.0
        %v451 = vsel %vm352, %v447, 0.0
        %v452 = vpack.c.bf16 %v450, %v450
        %v453 = vpack.c.bf16 %v451, %v451
        %v455 = vunpack.c.l.b16 %v452
        %v456 = vpack.c.b16 %v455, %v455
        %v457 = vrot.slane %v456, 6
        %459 = vst [vmem:[#allocation3 + $0x8] sm:$0xc] %v457
        %v461 = vunpack.c.l.b16 %v453
        %v462 = vpack.c.b16 %v461, %v461
        %v463 = vrot.slane %v462, 6
        %465 = vst [vmem:[%s314 + $0x8] sm:$0xc] %v463
        %v466 = vld [vmem:[#allocation2] sm:$0xff]
        %v467 = vld [vmem:[#allocation2 + $0x8] sm:$0xf]
        %v470 = vcombine.high %v466, %v466
        %471 = vrot.lane.b32.xlu0 %v466, 96
        %v472 = vpop.permute.xlu0 %471
        %473 = vrot.lane.b32.xlu0 %v470, 96
        %v474 = vpop.permute.xlu0 %473
        %475 = vrot.lane.b32.xlu0 %v467, 96
        %v476 = vpop.permute.xlu0 %475
        %vm477 = vcmask 785408
        %v478 = vsel %vm477, %v472, %v474
        %v479 = vsel %vm477, %v474, %v476
        %v482 = vsel %vm304, %v478, 0.0
        %v483 = vsel %vm305, %v479, 0.0
        %v484 = vpack.c.bf16 %v482, %v482
        %v485 = vpack.c.bf16 %v483, %v483
        %486 = vst [vmem:[#allocation3 + $0xc] sm:$0x3] %v484
        %487 = vst [vmem:[%s314 + $0xc] sm:$0x3] %v485
        %v488 = vld [vmem:[#allocation2] sm:$0xff]
        %v489 = vld [vmem:[#allocation2 + $0x8] sm:$0xf]
        %v491 = vcombine.high %v488, %v488
        %v493 = vpack.c.bf16 %v488, %v488
        %v494 = vpack.c.bf16 %v491, %v491
        %v495 = vpack.c.bf16 %v489, %v489
        %v498 = vunpack.c.l.b16 %v493
        %v499 = vunpack.c.l.b16 %v494
        %v500 = vpack.c.b16 %v499, %v498
        %v501 = vrot.slane %v500, 6
        %502 = vrot.lane.b32.xlu0 %v501, 95
        %v503 = vpop.permute.xlu0 %502
        %v504 = vrot.slane %v503, 4
        %vm505 = vcmask 777216
        %v506 = vsel %vm505, %v503, %v504
        %508 = vst [vmem:[#allocation3 + $0xc] sm:$0xc] %v506
        %v510 = vunpack.c.l.b16 %v495
        %v511 = vpack.c.b16 %v510, %v499
        %v512 = vrot.slane %v511, 6
        %513 = vrot.lane.b32.xlu0 %v512, 95
        %v514 = vpop.permute.xlu0 %513
        %v515 = vrot.slane %v514, 4
        %v516 = vsel %vm505, %v514, %v515
        %518 = vst [vmem:[%s314 + $0xc] sm:$0xc] %v516
        %v519 = vld [vmem:[#allocation2] sm:$0xff]
        %v520 = vld [vmem:[#allocation2 + $0x8] sm:$0xf]
        %v523 = vcombine.high %v519, %v519
        %524 = vrot.lane.b32.xlu0 %v519, 94
        %v525 = vpop.permute.xlu0 %524
        %526 = vrot.lane.b32.xlu0 %v523, 94
        %v527 = vpop.permute.xlu0 %526
        %528 = vrot.lane.b32.xlu0 %v520, 94
        %v529 = vpop.permute.xlu0 %528
        %vm530 = vcmask 769024
        %v531 = vsel %vm530, %v525, %v527
        %v532 = vsel %vm530, %v527, %v529
        %v535 = vsel %vm351, %v531, 0.0
        %v536 = vsel %vm352, %v532, 0.0
        %v537 = vpack.c.bf16 %v535, %v535
        %v538 = vpack.c.bf16 %v536, %v536
        %539 = vst [vmem:[#allocation3 + $0x10] sm:$0x3] %v537
        %540 = vst [vmem:[%s314 + $0x10] sm:$0x3] %v538
      $region40: #{basic_block_forward.3} parent=35 // pred_fallthru
        _
      %v541 = vld [vmem:[%s3] sm:$0x3]
      %s542 = smul.u32 %s20, 5
      %s543 = smul.addr %s542, 4
      %s544 = scalar_lea.vmem [#allocation3], %s543
      %v545 = vld [vmem:[%s544] sm:$0xf]
      %v546 = vld [vmem:[%s544 + $0x4] sm:$0xf]
      %v547 = vld [vmem:[%s544 + $0x8] sm:$0xf]
      %v548 = vld [vmem:[%s544 + $0xc] sm:$0xf]
      %v549 = vld [vmem:[%s544 + $0x10] sm:$0x3]
      %v555 = vunpack.c.l.b16 %v545
      %v556 = vunpack.c.l.b16 %v546
      %v557 = vunpack.c.l.b16 %v547
      %v558 = vunpack.c.l.b16 %v548
      %v559 = vunpack.c.l.b16 %v549
      %v560 = vpack.c.b16 %v556, %v555
      %v561 = vpack.c.b16 %v558, %v557
      %v562 = vpack.c.b16 %v559, %v559
      %vm565 = vcmask 293888
      %v567 = vsel %vm565, %v541, 0
      %vm569 = vcmask 1041408
      %v571 = vsel %vm569, %v562, 0
      %573 = vmatprep.subr.bf16.mxu0 0
      %574 = vmatpush1.bf16.msra.mxu0 %v560
      %575 = vmatprep.subr.bf16.mxu0 0
      %576 = vmatpush1.bf16.msra.mxu0 %v561
      %577 = vmatprep.subr.bf16.mxu0 0
      %578 = vmatpush1.bf16.msra.mxu0 %v571
      %579 = vmatprep.subr.bf16.mxu0 0
      %580 = vmatpush1.bf16.msra.mxu0 0
      %581 = vmatprep.subr.bf16.mxu0 0
      %582 = vmatpush1.bf16.msra.mxu0 0
      %583 = vmatprep.subr.bf16.mxu0 0
      %584 = vmatpush1.bf16.msra.mxu0 0
      %585 = vmatprep.subr.bf16.mxu0 0
      %586 = vmatpush1.bf16.msra.mxu0 0
      %587 = vmatprep.subr.bf16.mxu0 0
      %588 = vmatpush1.bf16.msra.mxu0 0
      %589 = vmatprep.subr.bf16.mxu0 0
      %590 = vmatpush1.bf16.msra.mxu0 0
      %591 = vmatprep.subr.bf16.mxu0 0
      %592 = vmatpush1.bf16.msra.mxu0 0
      %593 = vmatprep.subr.bf16.mxu0 0
      %594 = vmatpush1.bf16.msra.mxu0 0
      %595 = vmatprep.subr.bf16.mxu0 0
      %596 = vmatpush1.bf16.msra.mxu0 0
      %597 = vmatprep.subr.bf16.mxu0 0
      %598 = vmatpush1.bf16.msra.mxu0 0
      %599 = vmatprep.subr.bf16.mxu0 0
      %600 = vmatpush1.bf16.msra.mxu0 0
      %601 = vmatprep.subr.bf16.mxu0 0
      %602 = vmatpush1.bf16.msra.mxu0 0
      %603 = vmatprep.subr.bf16.mxu0 0
      %604 = vmatpush1.bf16.msra.mxu0 0
      %605 = vmatprep.mubr.bf16.mxu0 0
      %606 = vmatmul.mubr.bf16.gmra.mrb[0].mxu0 %v567
      %v607 = vpop.f32.mrb[0].mxu0
      %v608 = vadd.f32 0.0, %v607
      %v609 = vpop.f32.mrb[0].mxu0
      %v610 = vpop.f32.mrb[0].mxu0
      %v611 = vpop.f32.mrb[0].mxu0
      %612 = vdwg.mxu0
      %613 = vst [vmem:[%s217] sm:$0xf] %v608
      %p614 = scmp.lt.s32.totalorder %s19, 1
      %s615 = scalar_select %p614, %s19, 1
      %p616 = scmp.lt.s32.totalorder %s20, 1
      %s617 = scalar_select %p616, %s20, 1
      %s618 = smul.addr %s615, 2
      %s619 = sadd.s32 %s617, %s618
      %s620 = smul.addr %s619, 4
      %s621 = scalar_lea.vmem %s4, %s620
      // Predicated region
      $region41: #{basic_block_forward.3} parent=35 // pred_check
        %p622 = pneg %p136
      $region42: #{basic_block_forward.3} parent=35 // pred_check_branch
        %624 = sbr.rel (%p622) target = $region44
      $region43: #{basic_block_forward.3} parent=35 // pred_region
        _
      $region44: #{basic_block_forward.3} parent=35 // pred_fallthru
        _
    $region36: #{basic_block_forward.3} parent=5 // pred_fallthru
      _
    %p625 = scmp.le.s32.totalorder 2, %s10
    // Predicated region
    $region45: #{basic_block_forward.3} parent=5 // pred_check
      %p626 = pneg %p625
    $region46: #{basic_block_forward.3} parent=5 // pred_check_branch
      %628 = sbr.rel (%p626) target = $region48
    $region47: #{basic_block_forward.3} parent=5 // pred_region
      %s629 = ssub.s32 %s10, 2
      // Predicated region
      $region49: #{basic_block_forward.3} parent=47 // pred_check
        %p630 = pneg %p142
      $region50: #{basic_block_forward.3} parent=47 // pred_check_branch
        %632 = sbr.rel (%p630) target = $region52
      $region51: #{basic_block_forward.3} parent=47 // pred_region
        %p633 = scmp.lt.s32.totalorder %s21, 1
        %s634 = scalar_select %p633, %s21, 1
        %p635 = scmp.lt.s32.totalorder %s22, 1
        %s636 = scalar_select %p635, %s22, 1
        %s637 = smul.addr %s634, 2
        %s638 = sadd.s32 %s636, %s637
        %s639 = smul.addr %s638, 4
        %s640 = scalar_lea.vmem %s4, %s639
      $region52: #{basic_block_forward.3} parent=47 // pred_fallthru
        _
    $region48: #{basic_block_forward.3} parent=5 // pred_fallthru
      _
  $region6: #{basic_block_forward.3} parent=0 // loop_footer
    %s14 = sadd.s32 1, %s10
  $region7: #{basic_block_forward.3} parent=0 // loop_footer_branch
    %9 = sbr.rel target = $region3
  $region8: #{basic_block_forward.3} parent=0 // loop_exit
    _

</llo_original>
